<compile_context>
chip_gen: v7x
topology: tpu7x:2x2x1
jax: 0.10.0
libtpu: 0.0.40
codegen_flags: <defaults>
</compile_context>

<pallas_src>
import jax
import jax.numpy as jnp
from jax.experimental import pallas as pl
from jax.experimental.pallas import tpu as pltpu


def _round_up(a, b):
    return (a + b - 1) // b * b


def gru_kernel(x_ref, h_ref, wzr_ref, wh_ref, bzr_ref, bh_ref, out_ref):
    x = x_ref[...]                           # (tm, D), native dtype
    h = h_ref[...]                           # (tm, D), native dtype
    D = x.shape[-1]

    wzr = wzr_ref[...]                       # (2D, 2D) = [Wz | Wr] along columns
    wh = wh_ref[...]                         # (2D, D)

    # z/r gates from one fused pair of matmuls:
    #   cat(x, h) @ [Wz|Wr] == x @ W[:D, :] + h @ W[D:, :]
    zr = (jnp.dot(x, wzr[:D, :], preferred_element_type=jnp.float32)
          + jnp.dot(h, wzr[D:, :], preferred_element_type=jnp.float32)
          + bzr_ref[...].astype(jnp.float32))
    z_t = jax.nn.sigmoid(zr[:, :D])
    r_t = jax.nn.sigmoid(zr[:, D:])

    hf = h.astype(jnp.float32)
    rh = (r_t * hf).astype(wh.dtype)

    # h_hat = tanh( cat(r_t * h, x) @ Wh + bh )   (note the (rh, x) ordering!)
    h_lin = (jnp.dot(rh, wh[:D, :], preferred_element_type=jnp.float32)
             + jnp.dot(x, wh[D:, :], preferred_element_type=jnp.float32)
             + bh_ref[...].astype(jnp.float32))
    h_hat = jnp.tanh(h_lin)

    # (1 - z)*h + z*h_hat  ==  h + z*(h_hat - h)
    out = hf + z_t * (h_hat - hf)
    out_ref[...] = out.astype(out_ref.dtype)


def gru_forward(x, h, wz, wr, wh, bz, br, bh, *, tm=512):
    """x, h: (M, D); wz/wr/wh: (2D, D); bz/br/bh: (1, D). Returns (M, D)."""
    M, D = x.shape
    dtype = x.dtype
    sub = 16 if dtype == jnp.bfloat16 else 8   # sublane packing granularity

    # Pack [Wz | Wr] so both gates come from one matmul pair.
    wzr = jnp.concatenate([wz, wr], axis=-1)   # (2D, 2D)
    bzr = jnp.concatenate([bz, br], axis=-1)   # (1, 2D)

    # Choose the row tile: as large as requested, sublane-aligned, and capped
    # so the whole working set stays well inside v7x's 64 MiB VMEM.
    itemsize = jnp.dtype(dtype).itemsize
    weight_bytes = (wzr.size + wh.size + bzr.size + bh.size) * itemsize
    vmem_budget = 48 * 1024 * 1024
    act_budget = max(vmem_budget - 2 * weight_bytes, 1 << 20)
    per_row = (3 * 2 + 4) * (2 * D) * 4        # conservative f32/2D-wide estimate
    tm_cap = max(sub, (act_budget // per_row) // sub * sub)
    tm_eff = min(_round_up(max(tm, sub), sub), tm_cap)

    M_pad = _round_up(M, sub)
    if tm_eff >= M_pad:
        tm_eff = M_pad
        # v7x has 2 TensorCores: give the 'parallel' grid axis >= 2 blocks.
        if M_pad >= 2 * sub and M_pad % (2 * sub) == 0:
            tm_eff = M_pad // 2
    M_pad = _round_up(M, tm_eff)

    if M_pad != M:
        pad = M_pad - M
        x = jnp.pad(x, ((0, pad), (0, 0)))
        h = jnp.pad(h, ((0, pad), (0, 0)))

    def build(single_buffer_weights):
        extra = {}
        if single_buffer_weights and hasattr(pl, "Buffered"):
            # Constant (grid-invariant) blocks: no point double-buffering them.
            extra = dict(pipeline_mode=pl.Buffered(1))
        cmap = lambda i: (0, 0)
        row_spec = pl.BlockSpec((tm_eff, D), lambda i: (i, 0))
        wzr_spec = pl.BlockSpec((2 * D, 2 * D), cmap, **extra)
        wh_spec = pl.BlockSpec((2 * D, D), cmap, **extra)
        bzr_spec = pl.BlockSpec((1, 2 * D), cmap, **extra)
        bh_spec = pl.BlockSpec((1, D), cmap, **extra)
        return pl.pallas_call(
            gru_kernel,
            out_shape=jax.ShapeDtypeStruct((M_pad, D), dtype),
            grid_spec=pltpu.PrefetchScalarGridSpec(
                num_scalar_prefetch=0,
                grid=(M_pad // tm_eff,),
                in_specs=[row_spec, row_spec,
                          wzr_spec, wh_spec, bzr_spec, bh_spec],
                out_specs=row_spec,
            ),
            compiler_params=pltpu.CompilerParams(
                dimension_semantics=("parallel",),
                vmem_limit_bytes=56 * 1024 * 1024,
            ),
        )

    args = (x, h, wzr, wh, bzr, bh)
    try:
        out = build(single_buffer_weights=True)(*args)
    except Exception:
        # Fallback for jax versions whose pallas_call pipeline rejects
        # pipeline_mode / Buffered(1): use default double-buffering.
        out = build(single_buffer_weights=False)(*args)

    return out[:M]


def gru_reference(x, h, wz, wr, wh, bz, br, bh):
    """Pure-JAX reference matching the PyTorch forward exactly."""
    xh = jnp.concatenate([x, h], axis=-1)
    z_t = jax.nn.sigmoid(xh @ wz + bz)
    r_t = jax.nn.sigmoid(xh @ wr + br)
    rh_x = jnp.concatenate([r_t * h, x], axis=-1)
    h_hat = jnp.tanh(rh_x @ wh + bh)
    return (1.0 - z_t) * h + z_t * h_hat


if __name__ == "__main__":
    batch, seq, d_model = 2, 8, 32
    M = batch * seq

    key = jax.random.PRNGKey(0)
    kx, kh, kwz, kwr, kwh, kbz, kbr, kbh = jax.random.split(key, 8)

    x = jax.random.normal(kx, (batch, seq, d_model), dtype=jnp.float32)
    h = jax.random.normal(kh, (batch, seq, d_model), dtype=jnp.float32)

    # Deterministic parameter init (shapes match Linear(2*d_model, d_model),
    # stored transposed so the kernel does x @ W + b).
    scale = 1.0 / jnp.sqrt(2.0 * d_model)
    wz = jax.random.uniform(kwz, (2 * d_model, d_model), jnp.float32, -scale, scale)
    wr = jax.random.uniform(kwr, (2 * d_model, d_model), jnp.float32, -scale, scale)
    wh = jax.random.uniform(kwh, (2 * d_model, d_model), jnp.float32, -scale, scale)
    bz = jax.random.uniform(kbz, (1, d_model), jnp.float32, -scale, scale)
    br = jax.random.uniform(kbr, (1, d_model), jnp.float32, -scale, scale)
    bh = jax.random.uniform(kbh, (1, d_model), jnp.float32, -scale, scale)

    x2 = x.reshape(M, d_model)
    h2 = h.reshape(M, d_model)

    out = gru_forward(x2, h2, wz, wr, wh, bz, br, bh)
    out = out.reshape(batch, seq, d_model)
    jax.block_until_ready(out)

    ref = gru_reference(x2, h2, wz, wr, wh, bz, br, bh).reshape(batch, seq, d_model)
    assert jnp.allclose(out, ref, atol=1e-5, rtol=1e-5), "mismatch vs reference"

    print("KERNEL_OK")
</pallas_src>

<mosaic_0001>
module attributes {stable_mosaic.version = 11 : i64} {
  func.func @gru_kernel(%arg0: i32, %arg1: memref<8x32xf32, #tpu.memory_space<vmem>>, %arg2: memref<8x32xf32, #tpu.memory_space<vmem>>, %arg3: memref<64x64xf32, #tpu.memory_space<vmem>>, %arg4: memref<64x32xf32, #tpu.memory_space<vmem>>, %arg5: memref<1x64xf32, #tpu.memory_space<vmem>>, %arg6: memref<1x32xf32, #tpu.memory_space<vmem>>, %arg7: memref<8x32xf32, #tpu.memory_space<vmem>>) attributes {dimension_semantics = [#tpu.dimension_semantics<parallel>], iteration_bounds = array<i64: 2>, scalar_prefetch = 0 : i64, scratch_operands = 0 : i64, tpu.core_type = #tpu.core_type<tc>, window_params = [{transform_indices = @transform_0, window_bounds = array<i64: 8, 32>}, {transform_indices = @transform_1, window_bounds = array<i64: 8, 32>}, {pipeline_mode = #tpu.pipeline_mode<synchronous>, transform_indices = @transform_2, window_bounds = array<i64: 64, 64>}, {pipeline_mode = #tpu.pipeline_mode<synchronous>, transform_indices = @transform_3, window_bounds = array<i64: 64, 32>}, {pipeline_mode = #tpu.pipeline_mode<synchronous>, transform_indices = @transform_4, window_bounds = array<i64: 1, 64>}, {pipeline_mode = #tpu.pipeline_mode<synchronous>, transform_indices = @transform_5, window_bounds = array<i64: 1, 32>}, {transform_indices = @transform_6, window_bounds = array<i64: 8, 32>}]} {
    %c0 = arith.constant 0 : index
    %c0_0 = arith.constant 0 : index
    %0 = vector.load %arg1[%c0, %c0_0] : memref<8x32xf32, #tpu.memory_space<vmem>>, vector<8x32xf32>
    %c0_1 = arith.constant 0 : index
    %c0_2 = arith.constant 0 : index
    %1 = vector.load %arg2[%c0_1, %c0_2] : memref<8x32xf32, #tpu.memory_space<vmem>>, vector<8x32xf32>
    %c0_3 = arith.constant 0 : index
    %c0_4 = arith.constant 0 : index
    %2 = vector.load %arg3[%c0_3, %c0_4] : memref<64x64xf32, #tpu.memory_space<vmem>>, vector<64x64xf32>
    %c0_5 = arith.constant 0 : index
    %c0_6 = arith.constant 0 : index
    %3 = vector.load %arg4[%c0_5, %c0_6] : memref<64x32xf32, #tpu.memory_space<vmem>>, vector<64x32xf32>
    %4 = vector.extract_strided_slice %2 {offsets = [0, 0], sizes = [32, 64], strides = [1, 1]} : vector<64x64xf32> to vector<32x64xf32>
    %cst = arith.constant dense<0.000000e+00> : vector<8x64xf32>
    %5 = tpu.matmul %0, %4, %cst {dimension_numbers = #tpu.dot_dimension_numbers<[1], [0], [0], [1], [0, 0, 1, 1], [], []>} : vector<8x32xf32>, vector<32x64xf32>, vector<8x64xf32> -> vector<8x64xf32>
    %6 = vector.extract_strided_slice %2 {offsets = [32, 0], sizes = [32, 64], strides = [1, 1]} : vector<64x64xf32> to vector<32x64xf32>
    %cst_7 = arith.constant dense<0.000000e+00> : vector<8x64xf32>
    %7 = tpu.matmul %1, %6, %cst_7 {dimension_numbers = #tpu.dot_dimension_numbers<[1], [0], [0], [1], [0, 0, 1, 1], [], []>} : vector<8x32xf32>, vector<32x64xf32>, vector<8x64xf32> -> vector<8x64xf32>
    %8 = arith.addf %5, %7 : vector<8x64xf32>
    %c0_8 = arith.constant 0 : index
    %c0_9 = arith.constant 0 : index
    %9 = vector.load %arg5[%c0_8, %c0_9] : memref<1x64xf32, #tpu.memory_space<vmem>>, vector<1x64xf32>
    %10 = vector.broadcast %9 : vector<1x64xf32> to vector<8x64xf32>
    %11 = arith.addf %8, %10 : vector<8x64xf32>
    %12 = vector.extract_strided_slice %11 {offsets = [0, 0], sizes = [8, 32], strides = [1, 1]} : vector<8x64xf32> to vector<8x32xf32>
    %13 = arith.negf %12 : vector<8x32xf32>
    %14 = math.exp %13 : vector<8x32xf32>
    %cst_10 = arith.constant 1.000000e+00 : f32
    %15 = vector.broadcast %cst_10 : f32 to vector<8x32xf32>
    %16 = arith.addf %15, %14 : vector<8x32xf32>
    %17 = arith.divf %15, %16 : vector<8x32xf32>
    %18 = vector.extract_strided_slice %11 {offsets = [0, 32], sizes = [8, 32], strides = [1, 1]} : vector<8x64xf32> to vector<8x32xf32>
    %19 = arith.negf %18 : vector<8x32xf32>
    %20 = math.exp %19 : vector<8x32xf32>
    %cst_11 = arith.constant 1.000000e+00 : f32
    %21 = vector.broadcast %cst_11 : f32 to vector<8x32xf32>
    %22 = arith.addf %21, %20 : vector<8x32xf32>
    %23 = arith.divf %21, %22 : vector<8x32xf32>
    %24 = arith.mulf %23, %1 : vector<8x32xf32>
    %25 = vector.extract_strided_slice %3 {offsets = [0, 0], sizes = [32, 32], strides = [1, 1]} : vector<64x32xf32> to vector<32x32xf32>
    %cst_12 = arith.constant dense<0.000000e+00> : vector<8x32xf32>
    %26 = tpu.matmul %24, %25, %cst_12 {dimension_numbers = #tpu.dot_dimension_numbers<[1], [0], [0], [1], [0, 0, 1, 1], [], []>} : vector<8x32xf32>, vector<32x32xf32>, vector<8x32xf32> -> vector<8x32xf32>
    %27 = vector.extract_strided_slice %3 {offsets = [32, 0], sizes = [32, 32], strides = [1, 1]} : vector<64x32xf32> to vector<32x32xf32>
    %cst_13 = arith.constant dense<0.000000e+00> : vector<8x32xf32>
    %28 = tpu.matmul %0, %27, %cst_13 {dimension_numbers = #tpu.dot_dimension_numbers<[1], [0], [0], [1], [0, 0, 1, 1], [], []>} : vector<8x32xf32>, vector<32x32xf32>, vector<8x32xf32> -> vector<8x32xf32>
    %29 = arith.addf %26, %28 : vector<8x32xf32>
    %c0_14 = arith.constant 0 : index
    %c0_15 = arith.constant 0 : index
    %30 = vector.load %arg6[%c0_14, %c0_15] : memref<1x32xf32, #tpu.memory_space<vmem>>, vector<1x32xf32>
    %31 = vector.broadcast %30 : vector<1x32xf32> to vector<8x32xf32>
    %32 = arith.addf %29, %31 : vector<8x32xf32>
    %33 = math.tanh %32 : vector<8x32xf32>
    %34 = arith.subf %33, %1 : vector<8x32xf32>
    %35 = arith.mulf %17, %34 : vector<8x32xf32>
    %36 = arith.addf %1, %35 : vector<8x32xf32>
    %c0_16 = arith.constant 0 : index
    %c0_17 = arith.constant 0 : index
    %37 = vector.load %arg7[%c0_16, %c0_17] : memref<8x32xf32, #tpu.memory_space<vmem>>, vector<8x32xf32>
    tpu.vector_store %arg7[%c0_16, %c0_17], %36 {strides = array<i32>} : memref<8x32xf32, #tpu.memory_space<vmem>>, vector<8x32xf32>,
    return
  }
  func.func @transform_0(%arg0: i32) -> (i32, i32) {
    %c0_i32 = arith.constant 0 : i32
    %c0_i32_0 = arith.constant 0 : i32
    return %arg0, %c0_i32 : i32, i32
  }
  func.func @transform_1(%arg0: i32) -> (i32, i32) {
    %c0_i32 = arith.constant 0 : i32
    %c0_i32_0 = arith.constant 0 : i32
    return %arg0, %c0_i32 : i32, i32
  }
  func.func @transform_2(%arg0: i32) -> (i32, i32) {
    %c0_i32 = arith.constant 0 : i32
    %c0_i32_0 = arith.constant 0 : i32
    %c0_i32_1 = arith.constant 0 : i32
    return %c0_i32, %c0_i32_0 : i32, i32
  }
  func.func @transform_3(%arg0: i32) -> (i32, i32) {
    %c0_i32 = arith.constant 0 : i32
    %c0_i32_0 = arith.constant 0 : i32
    %c0_i32_1 = arith.constant 0 : i32
    return %c0_i32, %c0_i32_0 : i32, i32
  }
  func.func @transform_4(%arg0: i32) -> (i32, i32) {
    %c0_i32 = arith.constant 0 : i32
    %c0_i32_0 = arith.constant 0 : i32
    %c0_i32_1 = arith.constant 0 : i32
    return %c0_i32, %c0_i32_0 : i32, i32
  }
  func.func @transform_5(%arg0: i32) -> (i32, i32) {
    %c0_i32 = arith.constant 0 : i32
    %c0_i32_0 = arith.constant 0 : i32
    %c0_i32_1 = arith.constant 0 : i32
    return %c0_i32, %c0_i32_0 : i32, i32
  }
  func.func @transform_6(%arg0: i32) -> (i32, i32) {
    %c0_i32 = arith.constant 0 : i32
    %c0_i32_0 = arith.constant 0 : i32
    return %arg0, %c0_i32 : i32, i32
  }
}

module attributes {stable_mosaic.version = 11 : i64} {
  func.func @gru_kernel(%arg0: i32, %arg1: memref<8x32xf32, #tpu.memory_space<vmem>>, %arg2: memref<8x32xf32, #tpu.memory_space<vmem>>, %arg3: memref<64x64xf32, #tpu.memory_space<vmem>>, %arg4: memref<64x32xf32, #tpu.memory_space<vmem>>, %arg5: memref<1x64xf32, #tpu.memory_space<vmem>>, %arg6: memref<1x32xf32, #tpu.memory_space<vmem>>, %arg7: memref<8x32xf32, #tpu.memory_space<vmem>>) attributes {dimension_semantics = [#tpu.dimension_semantics<parallel>], iteration_bounds = array<i64: 2>, scalar_prefetch = 0 : i64, scratch_operands = 0 : i64, tpu.core_type = #tpu.core_type<tc>, window_params = [{transform_indices = @transform_0, window_bounds = array<i64: 8, 32>}, {transform_indices = @transform_1, window_bounds = array<i64: 8, 32>}, {pipeline_mode = #tpu.pipeline_mode<synchronous>, transform_indices = @transform_2, window_bounds = array<i64: 64, 64>}, {pipeline_mode = #tpu.pipeline_mode<synchronous>, transform_indices = @transform_3, window_bounds = array<i64: 64, 32>}, {pipeline_mode = #tpu.pipeline_mode<synchronous>, transform_indices = @transform_4, window_bounds = array<i64: 1, 64>}, {pipeline_mode = #tpu.pipeline_mode<synchronous>, transform_indices = @transform_5, window_bounds = array<i64: 1, 32>}, {transform_indices = @transform_6, window_bounds = array<i64: 8, 32>}]} {
    %c0 = arith.constant 0 : index
    %c0_0 = arith.constant 0 : index
    %0 = vector.load %arg1[%c0, %c0_0] : memref<8x32xf32, #tpu.memory_space<vmem>>, vector<8x32xf32>
    %c0_1 = arith.constant 0 : index
    %c0_2 = arith.constant 0 : index
    %1 = vector.load %arg2[%c0_1, %c0_2] : memref<8x32xf32, #tpu.memory_space<vmem>>, vector<8x32xf32>
    %c0_3 = arith.constant 0 : index
    %c0_4 = arith.constant 0 : index
    %2 = vector.load %arg3[%c0_3, %c0_4] : memref<64x64xf32, #tpu.memory_space<vmem>>, vector<64x64xf32>
    %c0_5 = arith.constant 0 : index
    %c0_6 = arith.constant 0 : index
    %3 = vector.load %arg4[%c0_5, %c0_6] : memref<64x32xf32, #tpu.memory_space<vmem>>, vector<64x32xf32>
    %4 = vector.extract_strided_slice %2 {offsets = [0, 0], sizes = [32, 64], strides = [1, 1]} : vector<64x64xf32> to vector<32x64xf32>
    %cst = arith.constant dense<0.000000e+00> : vector<8x64xf32>
    %5 = tpu.matmul %0, %4, %cst {dimension_numbers = #tpu.dot_dimension_numbers<[1], [0], [0], [1], [0, 0, 1, 1], [], []>} : vector<8x32xf32>, vector<32x64xf32>, vector<8x64xf32> -> vector<8x64xf32>
    %6 = vector.extract_strided_slice %2 {offsets = [32, 0], sizes = [32, 64], strides = [1, 1]} : vector<64x64xf32> to vector<32x64xf32>
    %cst_7 = arith.constant dense<0.000000e+00> : vector<8x64xf32>
    %7 = tpu.matmul %1, %6, %cst_7 {dimension_numbers = #tpu.dot_dimension_numbers<[1], [0], [0], [1], [0, 0, 1, 1], [], []>} : vector<8x32xf32>, vector<32x64xf32>, vector<8x64xf32> -> vector<8x64xf32>
    %8 = arith.addf %5, %7 : vector<8x64xf32>
    %c0_8 = arith.constant 0 : index
    %c0_9 = arith.constant 0 : index
    %9 = vector.load %arg5[%c0_8, %c0_9] : memref<1x64xf32, #tpu.memory_space<vmem>>, vector<1x64xf32>
    %10 = vector.broadcast %9 : vector<1x64xf32> to vector<8x64xf32>
    %11 = arith.addf %8, %10 : vector<8x64xf32>
    %12 = vector.extract_strided_slice %11 {offsets = [0, 0], sizes = [8, 32], strides = [1, 1]} : vector<8x64xf32> to vector<8x32xf32>
    %13 = arith.negf %12 : vector<8x32xf32>
    %14 = math.exp %13 : vector<8x32xf32>
    %cst_10 = arith.constant 1.000000e+00 : f32
    %15 = vector.broadcast %cst_10 : f32 to vector<8x32xf32>
    %16 = arith.addf %15, %14 : vector<8x32xf32>
    %17 = arith.divf %15, %16 : vector<8x32xf32>
    %18 = vector.extract_strided_slice %11 {offsets = [0, 32], sizes = [8, 32], strides = [1, 1]} : vector<8x64xf32> to vector<8x32xf32>
    %19 = arith.negf %18 : vector<8x32xf32>
    %20 = math.exp %19 : vector<8x32xf32>
    %cst_11 = arith.constant 1.000000e+00 : f32
    %21 = vector.broadcast %cst_11 : f32 to vector<8x32xf32>
    %22 = arith.addf %21, %20 : vector<8x32xf32>
    %23 = arith.divf %21, %22 : vector<8x32xf32>
    %24 = arith.mulf %23, %1 : vector<8x32xf32>
    %25 = vector.extract_strided_slice %3 {offsets = [0, 0], sizes = [32, 32], strides = [1, 1]} : vector<64x32xf32> to vector<32x32xf32>
    %cst_12 = arith.constant dense<0.000000e+00> : vector<8x32xf32>
    %26 = tpu.matmul %24, %25, %cst_12 {dimension_numbers = #tpu.dot_dimension_numbers<[1], [0], [0], [1], [0, 0, 1, 1], [], []>} : vector<8x32xf32>, vector<32x32xf32>, vector<8x32xf32> -> vector<8x32xf32>
    %27 = vector.extract_strided_slice %3 {offsets = [32, 0], sizes = [32, 32], strides = [1, 1]} : vector<64x32xf32> to vector<32x32xf32>
    %cst_13 = arith.constant dense<0.000000e+00> : vector<8x32xf32>
    %28 = tpu.matmul %0, %27, %cst_13 {dimension_numbers = #tpu.dot_dimension_numbers<[1], [0], [0], [1], [0, 0, 1, 1], [], []>} : vector<8x32xf32>, vector<32x32xf32>, vector<8x32xf32> -> vector<8x32xf32>
    %29 = arith.addf %26, %28 : vector<8x32xf32>
    %c0_14 = arith.constant 0 : index
    %c0_15 = arith.constant 0 : index
    %30 = vector.load %arg6[%c0_14, %c0_15] : memref<1x32xf32, #tpu.memory_space<vmem>>, vector<1x32xf32>
    %31 = vector.broadcast %30 : vector<1x32xf32> to vector<8x32xf32>
    %32 = arith.addf %29, %31 : vector<8x32xf32>
    %33 = math.tanh %32 : vector<8x32xf32>
    %34 = arith.subf %33, %1 : vector<8x32xf32>
    %35 = arith.mulf %17, %34 : vector<8x32xf32>
    %36 = arith.addf %1, %35 : vector<8x32xf32>
    %c0_16 = arith.constant 0 : index
    %c0_17 = arith.constant 0 : index
    %37 = vector.load %arg7[%c0_16, %c0_17] : memref<8x32xf32, #tpu.memory_space<vmem>>, vector<8x32xf32>
    tpu.vector_store %arg7[%c0_16, %c0_17], %36 {strides = array<i32>} : memref<8x32xf32, #tpu.memory_space<vmem>>, vector<8x32xf32>,
    return
  }
  func.func @transform_0(%arg0: i32) -> (i32, i32) {
    %c0_i32 = arith.constant 0 : i32
    %c0_i32_0 = arith.constant 0 : i32
    return %arg0, %c0_i32 : i32, i32
  }
  func.func @transform_1(%arg0: i32) -> (i32, i32) {
    %c0_i32 = arith.constant 0 : i32
    %c0_i32_0 = arith.constant 0 : i32
    return %arg0, %c0_i32 : i32, i32
  }
  func.func @transform_2(%arg0: i32) -> (i32, i32) {
    %c0_i32 = arith.constant 0 : i32
    %c0_i32_0 = arith.constant 0 : i32
    %c0_i32_1 = arith.constant 0 : i32
    return %c0_i32, %c0_i32_0 : i32, i32
  }
  func.func @transform_3(%arg0: i32) -> (i32, i32) {
    %c0_i32 = arith.constant 0 : i32
    %c0_i32_0 = arith.constant 0 : i32
    %c0_i32_1 = arith.constant 0 : i32
    return %c0_i32, %c0_i32_0 : i32, i32
  }
  func.func @transform_4(%arg0: i32) -> (i32, i32) {
    %c0_i32 = arith.constant 0 : i32
    %c0_i32_0 = arith.constant 0 : i32
    %c0_i32_1 = arith.constant 0 : i32
    return %c0_i32, %c0_i32_0 : i32, i32
  }
  func.func @transform_5(%arg0: i32) -> (i32, i32) {
    %c0_i32 = arith.constant 0 : i32
    %c0_i32_0 = arith.constant 0 : i32
    %c0_i32_1 = arith.constant 0 : i32
    return %c0_i32, %c0_i32_0 : i32, i32
  }
  func.func @transform_6(%arg0: i32) -> (i32, i32) {
    %c0_i32 = arith.constant 0 : i32
    %c0_i32_0 = arith.constant 0 : i32
    return %arg0, %c0_i32 : i32, i32
  }
}

</mosaic_0001>

<llo_original>
// kernel: tpu_custom_call.1
$region0: #{tpu_custom_call.1}
  #allocation0 [shape = 'u32[]', space=smem, size = 0x4, offset = 0x4, fixed_abs, tag = 'smem constant byte address 0x4 - core index']
  #allocation1 [shape = 'u32[144,128]{1,0:T(1,128)}', space=vmem, size = 0x12000, scoped, tag = 'internal scratch']
  %s0 = inlined_call_operand.vmem [shape: f32[16,32], index: 0, kind: input, shape index: {}]
  %s1 = inlined_call_operand.vmem [shape: f32[16,32], index: 1, kind: input, shape index: {}]
  %s2 = inlined_call_operand.vmem [shape: f32[64,64], index: 2, kind: input, shape index: {}]
  %s3 = inlined_call_operand.vmem [shape: f32[64,32], index: 3, kind: input, shape index: {}]
  %s4 = inlined_call_operand.vmem [shape: f32[1,64], index: 4, kind: input, shape index: {}]
  %s5 = inlined_call_operand.vmem [shape: f32[1,32], index: 5, kind: input, shape index: {}]
  %s6 = inlined_call_operand.hbm [shape: f32[16,32], index: 6, kind: output, shape index: {}]
  %s7 = sld [smem:[#allocation0]]
  $region57: #{tpu_custom_call.1} parent=0
    _
  %s9 = ssub.s32 1, %s7
  %s10 = scalar_select 0, %s9, %s7
  $region1: #{tpu_custom_call.1} parent=0
    #allocation2 [shape = 'u8[8192]{0}', space=vmem, size = 0x2000, scoped, tag = 'output window, operand 0']
    #allocation3 [shape = 's32[2]{0}', space=sflag, size = 0x8, scoped, tag = 'scoped memory for tpu_custom_call.1']
    %11 = vsyncpa [#allocation3], 0
    %s12 = scalar_lea.sflag [#allocation3], 1
    %13 = vsyncpa %s12, 0
    loop: start=0, step=1, limit=4
    $region2: #{tpu_custom_call.1} parent=1 // loop_pre_header
      _
    $region3: #{tpu_custom_call.1} parent=1 // loop_header
      %s15 = sphi 0, %s19
      %p16 = scmp.ge.s32.totalorder %s15, 4
      %s25 = sphi 0, %s27
      %s28 = sphi 0, %s25
      %s29 = sphi 0, %s28
      %s45 = sphi 0, %s29
      %s51 = sphi 0, %s53
      %s54 = sphi 0, %s51
      %s55 = sphi 0, %s54
      %s71 = sphi 0, %s55
      %s75 = sphi 0, %s75
      %s77 = sphi 0, %s75
      %s78 = sphi 0, %s77
      %s92 = sphi 0, %s78
      %s96 = sphi 0, %s96
      %s98 = sphi 0, %s96
      %s99 = sphi 0, %s98
      %s113 = sphi 0, %s99
      %s117 = sphi 0, %s117
      %s119 = sphi 0, %s117
      %s120 = sphi 0, %s119
      %s134 = sphi 0, %s120
      %s138 = sphi 0, %s138
      %s140 = sphi 0, %s138
      %s141 = sphi 0, %s140
      %s155 = sphi 0, %s141
      %s161 = sphi 0, %s163
      %s164 = sphi 0, %s161
      %s165 = sphi 0, %s164
      %s181 = sphi 0, %s165
    $region4: #{tpu_custom_call.1} parent=1 // loop_header_branch
      %18 = sbr.rel (%p16) target = $region8
    $region5: #{tpu_custom_call.1} parent=1 // loop_body
      %s20 = ssub.s32 %s15, 1
      %s21 = ssub.s32 %s15, 2
      %s22 = sadd.s32 %s15, 1
      %s23 = ssub.s32 %s15, %s22
      %p24 = scmp.eq.s32.totalorder %s23, 0
      %s26 = sadd.s32 %s25, 1
      %s27 = scalar_select %p24, %s25, %s26
      %p30 = pneg %p24
      %p31 = scmp.eq.s32.totalorder %s15, 1
      %p32 = por %p30, %p31
      %p33 = scmp.ne.s32.totalorder %s25, %s28
      %p34 = scmp.eq.s32.totalorder %s15, 0
      %p35 = por %p33, %p34
      %p36 = scmp.ne.s32.totalorder %s25, %s28
      %p37 = scmp.eq.s32.totalorder %s20, 1
      %p38 = por %p36, %p37
      %p39 = scmp.ne.s32.totalorder %s28, %s29
      %p40 = scmp.eq.s32.totalorder %s20, 0
      %p41 = por %p39, %p40
      %p42 = scmp.ne.s32.totalorder %s28, %s29
      %p43 = scmp.eq.s32.totalorder %s21, 1
      %p44 = por %p42, %p43
      %p46 = scmp.ne.s32.totalorder %s29, %s45
      %p47 = scmp.eq.s32.totalorder %s21, 0
      %p48 = por %p46, %p47
      %s49 = ssub.s32 %s15, %s22
      %p50 = scmp.eq.s32.totalorder %s49, 0
      %s52 = sadd.s32 %s51, 1
      %s53 = scalar_select %p50, %s51, %s52
      %p56 = pneg %p50
      %p57 = scmp.eq.s32.totalorder %s15, 1
      %p58 = por %p56, %p57
      %p59 = scmp.ne.s32.totalorder %s51, %s54
      %p60 = scmp.eq.s32.totalorder %s15, 0
      %p61 = por %p59, %p60
      %p62 = scmp.ne.s32.totalorder %s51, %s54
      %p63 = scmp.eq.s32.totalorder %s20, 1
      %p64 = por %p62, %p63
      %p65 = scmp.ne.s32.totalorder %s54, %s55
      %p66 = scmp.eq.s32.totalorder %s20, 0
      %p67 = por %p65, %p66
      %p68 = scmp.ne.s32.totalorder %s54, %s55
      %p69 = scmp.eq.s32.totalorder %s21, 1
      %p70 = por %p68, %p69
      %p72 = scmp.ne.s32.totalorder %s55, %s71
      %p73 = scmp.eq.s32.totalorder %s21, 0
      %p74 = por %p72, %p73
      %s76 = sadd.s32 %s75, 1
      %p79 = scmp.eq.s32.totalorder %s15, 1
      %p80 = scmp.ne.s32.totalorder %s75, %s77
      %p81 = scmp.eq.s32.totalorder %s15, 0
      %p82 = por %p80, %p81
      %p83 = scmp.ne.s32.totalorder %s75, %s77
      %p84 = scmp.eq.s32.totalorder %s20, 1
      %p85 = por %p83, %p84
      %p86 = scmp.ne.s32.totalorder %s77, %s78
      %p87 = scmp.eq.s32.totalorder %s20, 0
      %p88 = por %p86, %p87
      %p89 = scmp.ne.s32.totalorder %s77, %s78
      %p90 = scmp.eq.s32.totalorder %s21, 1
      %p91 = por %p89, %p90
      %p93 = scmp.ne.s32.totalorder %s78, %s92
      %p94 = scmp.eq.s32.totalorder %s21, 0
      %p95 = por %p93, %p94
      %s97 = sadd.s32 %s96, 1
      %p100 = scmp.eq.s32.totalorder %s15, 1
      %p101 = scmp.ne.s32.totalorder %s96, %s98
      %p102 = scmp.eq.s32.totalorder %s15, 0
      %p103 = por %p101, %p102
      %p104 = scmp.ne.s32.totalorder %s96, %s98
      %p105 = scmp.eq.s32.totalorder %s20, 1
      %p106 = por %p104, %p105
      %p107 = scmp.ne.s32.totalorder %s98, %s99
      %p108 = scmp.eq.s32.totalorder %s20, 0
      %p109 = por %p107, %p108
      %p110 = scmp.ne.s32.totalorder %s98, %s99
      %p111 = scmp.eq.s32.totalorder %s21, 1
      %p112 = por %p110, %p111
      %p114 = scmp.ne.s32.totalorder %s99, %s113
      %p115 = scmp.eq.s32.totalorder %s21, 0
      %p116 = por %p114, %p115
      %s118 = sadd.s32 %s117, 1
      %p121 = scmp.eq.s32.totalorder %s15, 1
      %p122 = scmp.ne.s32.totalorder %s117, %s119
      %p123 = scmp.eq.s32.totalorder %s15, 0
      %p124 = por %p122, %p123
      %p125 = scmp.ne.s32.totalorder %s117, %s119
      %p126 = scmp.eq.s32.totalorder %s20, 1
      %p127 = por %p125, %p126
      %p128 = scmp.ne.s32.totalorder %s119, %s120
      %p129 = scmp.eq.s32.totalorder %s20, 0
      %p130 = por %p128, %p129
      %p131 = scmp.ne.s32.totalorder %s119, %s120
      %p132 = scmp.eq.s32.totalorder %s21, 1
      %p133 = por %p131, %p132
      %p135 = scmp.ne.s32.totalorder %s120, %s134
      %p136 = scmp.eq.s32.totalorder %s21, 0
      %p137 = por %p135, %p136
      %s139 = sadd.s32 %s138, 1
      %p142 = scmp.eq.s32.totalorder %s15, 1
      %p143 = scmp.ne.s32.totalorder %s138, %s140
      %p144 = scmp.eq.s32.totalorder %s15, 0
      %p145 = por %p143, %p144
      %p146 = scmp.ne.s32.totalorder %s138, %s140
      %p147 = scmp.eq.s32.totalorder %s20, 1
      %p148 = por %p146, %p147
      %p149 = scmp.ne.s32.totalorder %s140, %s141
      %p150 = scmp.eq.s32.totalorder %s20, 0
      %p151 = por %p149, %p150
      %p152 = scmp.ne.s32.totalorder %s140, %s141
      %p153 = scmp.eq.s32.totalorder %s21, 1
      %p154 = por %p152, %p153
      %p156 = scmp.ne.s32.totalorder %s141, %s155
      %p157 = scmp.eq.s32.totalorder %s21, 0
      %p158 = por %p156, %p157
      %s159 = ssub.s32 %s15, %s22
      %p160 = scmp.eq.s32.totalorder %s159, 0
      %s162 = sadd.s32 %s161, 1
      %s163 = scalar_select %p160, %s161, %s162
      %p166 = pneg %p160
      %p167 = scmp.eq.s32.totalorder %s15, 1
      %p168 = por %p166, %p167
      %p169 = scmp.ne.s32.totalorder %s161, %s164
      %p170 = scmp.eq.s32.totalorder %s15, 0
      %p171 = por %p169, %p170
      %p172 = scmp.ne.s32.totalorder %s161, %s164
      %p173 = scmp.eq.s32.totalorder %s20, 1
      %p174 = por %p172, %p173
      %p175 = scmp.ne.s32.totalorder %s164, %s165
      %p176 = scmp.eq.s32.totalorder %s20, 0
      %p177 = por %p175, %p176
      %p178 = scmp.ne.s32.totalorder %s164, %s165
      %p179 = scmp.eq.s32.totalorder %s21, 1
      %p180 = por %p178, %p179
      %p182 = scmp.ne.s32.totalorder %s165, %s181
      %p183 = scmp.eq.s32.totalorder %s21, 0
      %p184 = por %p182, %p183
      %p185 = scmp.le.s32.totalorder 1, %s15
      %p186 = scmp.lt.s32.totalorder %s15, 3
      %p187 = pnand %p185, %p186
      %p188 = pneg %p187
      // Predicated region
      $region9: #{tpu_custom_call.1} parent=5 // pred_check
        _
      $region10: #{tpu_custom_call.1} parent=5 // pred_check_branch
        %190 = sbr.rel (%p187) target = $region12
      $region11: #{tpu_custom_call.1} parent=5 // pred_region
        %s191 = ssub.s32 %s15, 1
        // Predicated region
        $region13: #{tpu_custom_call.1} parent=11 // pred_check
          %p192 = pneg %p88
        $region14: #{tpu_custom_call.1} parent=11 // pred_check_branch
          %194 = sbr.rel (%p192) target = $region16
        $region15: #{tpu_custom_call.1} parent=11 // pred_region
          _
        $region16: #{tpu_custom_call.1} parent=11 // pred_fallthru
          _
        // Predicated region
        $region17: #{tpu_custom_call.1} parent=11 // pred_check
          %p195 = pneg %p109
        $region18: #{tpu_custom_call.1} parent=11 // pred_check_branch
          %197 = sbr.rel (%p195) target = $region20
        $region19: #{tpu_custom_call.1} parent=11 // pred_region
          _
        $region20: #{tpu_custom_call.1} parent=11 // pred_fallthru
          _
        // Predicated region
        $region21: #{tpu_custom_call.1} parent=11 // pred_check
          %p198 = pneg %p130
        $region22: #{tpu_custom_call.1} parent=11 // pred_check_branch
          %200 = sbr.rel (%p198) target = $region24
        $region23: #{tpu_custom_call.1} parent=11 // pred_region
          _
        $region24: #{tpu_custom_call.1} parent=11 // pred_fallthru
          _
        // Predicated region
        $region25: #{tpu_custom_call.1} parent=11 // pred_check
          %p201 = pneg %p151
        $region26: #{tpu_custom_call.1} parent=11 // pred_check_branch
          %203 = sbr.rel (%p201) target = $region28
        $region27: #{tpu_custom_call.1} parent=11 // pred_region
          _
        $region28: #{tpu_custom_call.1} parent=11 // pred_fallthru
          _
      $region12: #{tpu_custom_call.1} parent=5 // pred_fallthru
        _
      %p204 = scmp.lt.s32.totalorder %s15, 2
      // Predicated region
      $region29: #{tpu_custom_call.1} parent=5 // pred_check
        %p205 = pneg %p204
      $region30: #{tpu_custom_call.1} parent=5 // pred_check_branch
        %207 = sbr.rel (%p205) target = $region32
      $region31: #{tpu_custom_call.1} parent=5 // pred_region
        // Predicated region
        $region33: #{tpu_custom_call.1} parent=31 // pred_check
          %p208 = pneg %p35
        $region34: #{tpu_custom_call.1} parent=31 // pred_check_branch
          %210 = sbr.rel (%p208) target = $region36
        $region35: #{tpu_custom_call.1} parent=31 // pred_region
          %p211 = scmp.lt.s32.totalorder %s15, 1
          %s212 = scalar_select %p211, %s15, 1
          %s213 = smul.addr %s212, 8
          %s214 = scalar_lea.vmem %s0, %s213
        $region36: #{tpu_custom_call.1} parent=31 // pred_fallthru
          _
        // Predicated region
        $region37: #{tpu_custom_call.1} parent=31 // pred_check
          %p215 = pneg %p61
        $region38: #{tpu_custom_call.1} parent=31 // pred_check_branch
          %217 = sbr.rel (%p215) target = $region40
        $region39: #{tpu_custom_call.1} parent=31 // pred_region
          %p218 = scmp.lt.s32.totalorder %s15, 1
          %s219 = scalar_select %p218, %s15, 1
          %s220 = smul.addr %s219, 8
          %s221 = scalar_lea.vmem %s1, %s220
        $region40: #{tpu_custom_call.1} parent=31 // pred_fallthru
          _
      $region32: #{tpu_custom_call.1} parent=5 // pred_fallthru
        _
      %p222 = scmp.le.s32.totalorder 1, %s15
      %p223 = scmp.lt.s32.totalorder %s15, 3
      %p224 = pnand %p222, %p223
      %p225 = pneg %p224
      // Predicated region
      $region41: #{tpu_custom_call.1} parent=5 // pred_check
        _
      $region42: #{tpu_custom_call.1} parent=5 // pred_check_branch
        %227 = sbr.rel (%p224) target = $region44
      $region43: #{tpu_custom_call.1} parent=5 // pred_region
        %s228 = ssub.s32 %s15, 1
        %p229 = scmp.lt.s32.totalorder %s20, 1
        %s230 = scalar_select %p229, %s20, 1
        %s231 = smul.addr %s230, 8
        %s232 = scalar_lea.vmem %s0, %s231
        %p233 = pneg %p41
        %p234 = pneg %p38
        %p235 = scmp.lt.s32.totalorder %s20, 1
        %s236 = scalar_select %p235, %s20, 1
        %s237 = smul.addr %s236, 8
        %s238 = scalar_lea.vmem %s1, %s237
        %p239 = pneg %p67
        %p240 = pneg %p64
        %p241 = pneg %p88
        %p242 = pneg %p85
        %p243 = pneg %p109
        %p244 = pneg %p106
        %p245 = pneg %p130
        %p246 = pneg %p127
        %p247 = pneg %p151
        %p248 = pneg %p148
        %p249 = pneg %p177
        %p250 = pneg %p174
        %s251 = sand.u32 %s164, 1
        %s252 = scalar_lea.sflag [#allocation3], %s251
        %s253 = sand.u32 %s164, 1
        %s254 = smul.addr %s253, 8
        %s255 = scalar_lea.vmem [#allocation2], %s254
        %p256 = scmp.lt.s32.totalorder %s20, 1
        %s257 = scalar_select %p256, %s20, 1
        %s258 = smul.addr %s257, 8
        %s259 = scalar_lea.vmem %s0, %s258
        %p260 = scmp.lt.s32.totalorder %s20, 1
        %s261 = scalar_select %p260, %s20, 1
        %s262 = smul.addr %s261, 8
        %s263 = scalar_lea.vmem %s1, %s262
        %v264 = vld [vmem:[%s259] sm:$0xff]
        %v265 = vld [vmem:[%s263] sm:$0xff]
        %v266 = vld [vmem:[%s2] sm:$0xff]
        %v267 = vld [vmem:[%s2 + $0x8] sm:$0xff]
        %v268 = vld [vmem:[%s2 + $0x10] sm:$0xff]
        %v269 = vld [vmem:[%s2 + $0x18] sm:$0xff]
        %v270 = vld [vmem:[%s2 + $0x20] sm:$0xff]
        %v271 = vld [vmem:[%s2 + $0x28] sm:$0xff]
        %v272 = vld [vmem:[%s2 + $0x30] sm:$0xff]
        %v273 = vld [vmem:[%s2 + $0x38] sm:$0xff]
        %v274 = vld [vmem:[%s3] sm:$0xff]
        %v275 = vld [vmem:[%s3 + $0x8] sm:$0xff]
        %v276 = vld [vmem:[%s3 + $0x10] sm:$0xff]
        %v277 = vld [vmem:[%s3 + $0x18] sm:$0xff]
        %v278 = vld [vmem:[%s3 + $0x20] sm:$0xff]
        %v279 = vld [vmem:[%s3 + $0x28] sm:$0xff]
        %v280 = vld [vmem:[%s3 + $0x30] sm:$0xff]
        %v281 = vld [vmem:[%s3 + $0x38] sm:$0xff]
        %vm282 = vcmask 261120
        %v284 = vsel %vm282, %v265, 0
        %286 = vmatprep.subr.mxu0 0.0
        %287 = vmatpush1.msra.mxu0 %v270
        %288 = vmatprep.subr.mxu0 0.0
        %289 = vmatpush1.msra.mxu0 %v271
        %290 = vmatprep.subr.mxu0 0.0
        %291 = vmatpush1.msra.mxu0 %v272
        %292 = vmatprep.subr.mxu0 0.0
        %293 = vmatpush1.msra.mxu0 %v273
        %294 = vmatprep.subr.mxu0 0.0
        %295 = vmatpush1.msra.mxu0 0.0
        %296 = vmatprep.subr.mxu0 0.0
        %297 = vmatpush1.msra.mxu0 0.0
        %298 = vmatprep.subr.mxu0 0.0
        %299 = vmatpush1.msra.mxu0 0.0
        %300 = vmatprep.subr.mxu0 0.0
        %301 = vmatpush1.msra.mxu0 0.0
        %302 = vmatprep.subr.mxu0 0.0
        %303 = vmatpush1.msra.mxu0 0.0
        %304 = vmatprep.subr.mxu0 0.0
        %305 = vmatpush1.msra.mxu0 0.0
        %306 = vmatprep.subr.mxu0 0.0
        %307 = vmatpush1.msra.mxu0 0.0
        %308 = vmatprep.subr.mxu0 0.0
        %309 = vmatpush1.msra.mxu0 0.0
        %310 = vmatprep.subr.mxu0 0.0
        %311 = vmatpush1.msra.mxu0 0.0
        %312 = vmatprep.subr.mxu0 0.0
        %313 = vmatpush1.msra.mxu0 0.0
        %314 = vmatprep.subr.mxu0 0.0
        %315 = vmatpush1.msra.mxu0 0.0
        %316 = vmatprep.subr.mxu0 0.0
        %317 = vmatpush1.msra.mxu0 0.0
        %318 = vmatprep.subr.mxu0 0.0
        %319 = vmatpush1.msra.mxu0 0.0
        %320 = vmatprep.subr.mxu0 0.0
        %321 = vmatpush1.msra.mxu0 0.0
        %322 = vmatprep.subr.mxu0 0.0
        %323 = vmatpush1.msra.mxu0 0.0
        %324 = vmatprep.subr.mxu0 0.0
        %325 = vmatpush1.msra.mxu0 0.0
        %326 = vmatprep.subr.mxu0 0.0
        %327 = vmatpush1.msra.mxu0 0.0
        %328 = vmatprep.subr.mxu0 0.0
        %329 = vmatpush1.msra.mxu0 0.0
        %330 = vmatprep.subr.mxu0 0.0
        %331 = vmatpush1.msra.mxu0 0.0
        %332 = vmatprep.subr.mxu0 0.0
        %333 = vmatpush1.msra.mxu0 0.0
        %334 = vmatprep.subr.mxu0 0.0
        %335 = vmatpush1.msra.mxu0 0.0
        %336 = vmatprep.subr.mxu0 0.0
        %337 = vmatpush1.msra.mxu0 0.0
        %338 = vmatprep.subr.mxu0 0.0
        %339 = vmatpush1.msra.mxu0 0.0
        %340 = vmatprep.subr.mxu0 0.0
        %341 = vmatpush1.msra.mxu0 0.0
        %342 = vmatprep.subr.mxu0 0.0
        %343 = vmatpush1.msra.mxu0 0.0
        %344 = vmatprep.subr.mxu0 0.0
        %345 = vmatpush1.msra.mxu0 0.0
        %346 = vmatprep.subr.mxu0 0.0
        %347 = vmatpush1.msra.mxu0 0.0
        %348 = vmatprep.subr.mxu0 0.0
        %349 = vmatpush1.msra.mxu0 0.0
        %350 = vmatprep.mubr.f32.mxu0 0.0
        %351 = vmatmul.mubr.f32.gmra.mrb[0].mxu0 %v284
        %v352 = vpop.f32.mrb[0].mxu0
        %v353 = vadd.f32 0.0, %v352
        %v354 = vpop.f32.mrb[0].mxu0
        %355 = vdwg.mxu0
        %v357 = vsel %vm282, %v264, 0
        %359 = vmatprep.subr.mxu0 0.0
        %360 = vmatpush1.msra.mxu0 %v266
        %361 = vmatprep.subr.mxu0 0.0
        %362 = vmatpush1.msra.mxu0 %v267
        %363 = vmatprep.subr.mxu0 0.0
        %364 = vmatpush1.msra.mxu0 %v268
        %365 = vmatprep.subr.mxu0 0.0
        %366 = vmatpush1.msra.mxu0 %v269
        %367 = vmatprep.subr.mxu0 0.0
        %368 = vmatpush1.msra.mxu0 0.0
        %369 = vmatprep.subr.mxu0 0.0
        %370 = vmatpush1.msra.mxu0 0.0
        %371 = vmatprep.subr.mxu0 0.0
        %372 = vmatpush1.msra.mxu0 0.0
        %373 = vmatprep.subr.mxu0 0.0
        %374 = vmatpush1.msra.mxu0 0.0
        %375 = vmatprep.subr.mxu0 0.0
        %376 = vmatpush1.msra.mxu0 0.0
        %377 = vmatprep.subr.mxu0 0.0
        %378 = vmatpush1.msra.mxu0 0.0
        %379 = vmatprep.subr.mxu0 0.0
        %380 = vmatpush1.msra.mxu0 0.0
        %381 = vmatprep.subr.mxu0 0.0
        %382 = vmatpush1.msra.mxu0 0.0
        %383 = vmatprep.subr.mxu0 0.0
        %384 = vmatpush1.msra.mxu0 0.0
        %385 = vmatprep.subr.mxu0 0.0
        %386 = vmatpush1.msra.mxu0 0.0
        %387 = vmatprep.subr.mxu0 0.0
        %388 = vmatpush1.msra.mxu0 0.0
        %389 = vmatprep.subr.mxu0 0.0
        %390 = vmatpush1.msra.mxu0 0.0
        %391 = vmatprep.subr.mxu0 0.0
        %392 = vmatpush1.msra.mxu0 0.0
        %393 = vmatprep.subr.mxu0 0.0
        %394 = vmatpush1.msra.mxu0 0.0
        %395 = vmatprep.subr.mxu0 0.0
        %396 = vmatpush1.msra.mxu0 0.0
        %397 = vmatprep.subr.mxu0 0.0
        %398 = vmatpush1.msra.mxu0 0.0
        %399 = vmatprep.subr.mxu0 0.0
        %400 = vmatpush1.msra.mxu0 0.0
        %401 = vmatprep.subr.mxu0 0.0
        %402 = vmatpush1.msra.mxu0 0.0
        %403 = vmatprep.subr.mxu0 0.0
        %404 = vmatpush1.msra.mxu0 0.0
        %405 = vmatprep.subr.mxu0 0.0
        %406 = vmatpush1.msra.mxu0 0.0
        %407 = vmatprep.subr.mxu0 0.0
        %408 = vmatpush1.msra.mxu0 0.0
        %409 = vmatprep.subr.mxu0 0.0
        %410 = vmatpush1.msra.mxu0 0.0
        %411 = vmatprep.subr.mxu0 0.0
        %412 = vmatpush1.msra.mxu0 0.0
        %413 = vmatprep.subr.mxu0 0.0
        %414 = vmatpush1.msra.mxu0 0.0
        %415 = vmatprep.subr.mxu0 0.0
        %416 = vmatpush1.msra.mxu0 0.0
        %417 = vmatprep.subr.mxu0 0.0
        %418 = vmatpush1.msra.mxu0 0.0
        %419 = vmatprep.subr.mxu0 0.0
        %420 = vmatpush1.msra.mxu0 0.0
        %421 = vmatprep.subr.mxu0 0.0
        %422 = vmatpush1.msra.mxu0 0.0
        %423 = vmatprep.mubr.f32.mxu0 0.0
        %424 = vmatmul.mubr.f32.gmra.mrb[0].mxu0 %v357
        %v425 = vpop.f32.mrb[0].mxu0
        %v426 = vadd.f32 %v353, %v425
        %v427 = vpop.f32.mrb[0].mxu0
        %428 = vdwg.mxu0
        %v429 = vld [vmem:[%s4] sm:$0x1]
        %v431 = vlaneseq
        %v432 = vshrl.u32 %v431, 7
        %v433 = vsub.s32 0, %v432
        %v434 = vrot.slane %v429, %v433
        %v436 = vadd.f32 %v426, %v434
        %v437 = vxor.u32 %v436, 2147483648
        %v438 = vmul.f32 %v437, 1.442695
        %v439 = vpow.pop %v438
        %v440 = vadd.f32 %v439, 1.0
        %v441 = vrcp.pop %v440
        %v442 = vmul.f32 1.0, %v441
        %443 = vrot.lane.b32.xlu0 %v265, 32
        %v444 = vpop.permute.xlu0 %443
        %v446 = vmul.f32 %v442, %v444
        %447 = vmatprep.subr.mxu0 0.0
        %448 = vmatpush1.msra.mxu0 %v278
        %449 = vmatprep.subr.mxu0 0.0
        %450 = vmatpush1.msra.mxu0 %v279
        %451 = vmatprep.subr.mxu0 0.0
        %452 = vmatpush1.msra.mxu0 %v280
        %453 = vmatprep.subr.mxu0 0.0
        %454 = vmatpush1.msra.mxu0 %v281
        %455 = vmatprep.subr.mxu0 0.0
        %456 = vmatpush1.msra.mxu0 0.0
        %457 = vmatprep.subr.mxu0 0.0
        %458 = vmatpush1.msra.mxu0 0.0
        %459 = vmatprep.subr.mxu0 0.0
        %460 = vmatpush1.msra.mxu0 0.0
        %461 = vmatprep.subr.mxu0 0.0
        %462 = vmatpush1.msra.mxu0 0.0
        %463 = vmatprep.subr.mxu0 0.0
        %464 = vmatpush1.msra.mxu0 0.0
        %465 = vmatprep.subr.mxu0 0.0
        %466 = vmatpush1.msra.mxu0 0.0
        %467 = vmatprep.subr.mxu0 0.0
        %468 = vmatpush1.msra.mxu0 0.0
        %469 = vmatprep.subr.mxu0 0.0
        %470 = vmatpush1.msra.mxu0 0.0
        %471 = vmatprep.subr.mxu0 0.0
        %472 = vmatpush1.msra.mxu0 0.0
        %473 = vmatprep.subr.mxu0 0.0
        %474 = vmatpush1.msra.mxu0 0.0
        %475 = vmatprep.subr.mxu0 0.0
        %476 = vmatpush1.msra.mxu0 0.0
        %477 = vmatprep.subr.mxu0 0.0
        %478 = vmatpush1.msra.mxu0 0.0
        %479 = vmatprep.subr.mxu0 0.0
        %480 = vmatpush1.msra.mxu0 0.0
        %481 = vmatprep.subr.mxu0 0.0
        %482 = vmatpush1.msra.mxu0 0.0
        %483 = vmatprep.subr.mxu0 0.0
        %484 = vmatpush1.msra.mxu0 0.0
        %485 = vmatprep.subr.mxu0 0.0
        %486 = vmatpush1.msra.mxu0 0.0
        %487 = vmatprep.subr.mxu0 0.0
        %488 = vmatpush1.msra.mxu0 0.0
        %489 = vmatprep.subr.mxu0 0.0
        %490 = vmatpush1.msra.mxu0 0.0
        %491 = vmatprep.subr.mxu0 0.0
        %492 = vmatpush1.msra.mxu0 0.0
        %493 = vmatprep.subr.mxu0 0.0
        %494 = vmatpush1.msra.mxu0 0.0
        %495 = vmatprep.subr.mxu0 0.0
        %496 = vmatpush1.msra.mxu0 0.0
        %497 = vmatprep.subr.mxu0 0.0
        %498 = vmatpush1.msra.mxu0 0.0
        %499 = vmatprep.subr.mxu0 0.0
        %500 = vmatpush1.msra.mxu0 0.0
        %501 = vmatprep.subr.mxu0 0.0
        %502 = vmatpush1.msra.mxu0 0.0
        %503 = vmatprep.subr.mxu0 0.0
        %504 = vmatpush1.msra.mxu0 0.0
        %505 = vmatprep.subr.mxu0 0.0
        %506 = vmatpush1.msra.mxu0 0.0
        %507 = vmatprep.subr.mxu0 0.0
        %508 = vmatpush1.msra.mxu0 0.0
        %509 = vmatprep.subr.mxu0 0.0
        %510 = vmatpush1.msra.mxu0 0.0
        %511 = vmatprep.mubr.f32.mxu0 0.0
        %512 = vmatmul.mubr.f32.gmra.mrb[0].mxu0 %v357
        %v513 = vpop.f32.mrb[0].mxu0
        %v514 = vadd.f32 0.0, %v513
        %v515 = vpop.f32.mrb[0].mxu0
        %516 = vdwg.mxu0
        %518 = vrot.lane.b32.xlu0 %v446, 96
        %v519 = vpop.permute.xlu0 %518
        %v520 = vsel %vm282, %v519, 0
        %522 = vmatprep.subr.mxu0 0.0
        %523 = vmatpush1.msra.mxu0 %v274
        %524 = vmatprep.subr.mxu0 0.0
        %525 = vmatpush1.msra.mxu0 %v275
        %526 = vmatprep.subr.mxu0 0.0
        %527 = vmatpush1.msra.mxu0 %v276
        %528 = vmatprep.subr.mxu0 0.0
        %529 = vmatpush1.msra.mxu0 %v277
        %530 = vmatprep.subr.mxu0 0.0
        %531 = vmatpush1.msra.mxu0 0.0
        %532 = vmatprep.subr.mxu0 0.0
        %533 = vmatpush1.msra.mxu0 0.0
        %534 = vmatprep.subr.mxu0 0.0
        %535 = vmatpush1.msra.mxu0 0.0
        %536 = vmatprep.subr.mxu0 0.0
        %537 = vmatpush1.msra.mxu0 0.0
        %538 = vmatprep.subr.mxu0 0.0
        %539 = vmatpush1.msra.mxu0 0.0
        %540 = vmatprep.subr.mxu0 0.0
        %541 = vmatpush1.msra.mxu0 0.0
        %542 = vmatprep.subr.mxu0 0.0
        %543 = vmatpush1.msra.mxu0 0.0
        %544 = vmatprep.subr.mxu0 0.0
        %545 = vmatpush1.msra.mxu0 0.0
        %546 = vmatprep.subr.mxu0 0.0
        %547 = vmatpush1.msra.mxu0 0.0
        %548 = vmatprep.subr.mxu0 0.0
        %549 = vmatpush1.msra.mxu0 0.0
        %550 = vmatprep.subr.mxu0 0.0
        %551 = vmatpush1.msra.mxu0 0.0
        %552 = vmatprep.subr.mxu0 0.0
        %553 = vmatpush1.msra.mxu0 0.0
        %554 = vmatprep.subr.mxu0 0.0
        %555 = vmatpush1.msra.mxu0 0.0
        %556 = vmatprep.subr.mxu0 0.0
        %557 = vmatpush1.msra.mxu0 0.0
        %558 = vmatprep.subr.mxu0 0.0
        %559 = vmatpush1.msra.mxu0 0.0
        %560 = vmatprep.subr.mxu0 0.0
        %561 = vmatpush1.msra.mxu0 0.0
        %562 = vmatprep.subr.mxu0 0.0
        %563 = vmatpush1.msra.mxu0 0.0
        %564 = vmatprep.subr.mxu0 0.0
        %565 = vmatpush1.msra.mxu0 0.0
        %566 = vmatprep.subr.mxu0 0.0
        %567 = vmatpush1.msra.mxu0 0.0
        %568 = vmatprep.subr.mxu0 0.0
        %569 = vmatpush1.msra.mxu0 0.0
        %570 = vmatprep.subr.mxu0 0.0
        %571 = vmatpush1.msra.mxu0 0.0
        %572 = vmatprep.subr.mxu0 0.0
        %573 = vmatpush1.msra.mxu0 0.0
        %574 = vmatprep.subr.mxu0 0.0
        %575 = vmatpush1.msra.mxu0 0.0
        %576 = vmatprep.subr.mxu0 0.0
        %577 = vmatpush1.msra.mxu0 0.0
        %578 = vmatprep.subr.mxu0 0.0
        %579 = vmatpush1.msra.mxu0 0.0
        %580 = vmatprep.subr.mxu0 0.0
        %581 = vmatpush1.msra.mxu0 0.0
        %582 = vmatprep.subr.mxu0 0.0
        %583 = vmatpush1.msra.mxu0 0.0
        %584 = vmatprep.subr.mxu0 0.0
        %585 = vmatpush1.msra.mxu0 0.0
        %586 = vmatprep.mubr.f32.mxu0 0.0
        %587 = vmatmul.mubr.f32.gmra.mrb[0].mxu0 %v520
        %v588 = vpop.f32.mrb[0].mxu0
        %v589 = vadd.f32 %v514, %v588
        %v590 = vpop.f32.mrb[0].mxu0
        %591 = vdwg.mxu0
        %v592 = vld [vmem:[%s5] sm:$0x1]
        %v594 = vlaneseq
        %v595 = vshrl.u32 %v594, 7
        %v596 = vsub.s32 0, %v595
        %v597 = vrot.slane %v592, %v596
        %v599 = vadd.f32 %v589, %v597
        %v600 = vtanh.pop %v599
        %v601 = vsub.f32 %v600, %v265
        %v602 = vmul.f32 %v442, %v601
        %v603 = vadd.f32 %v265, %v602
        %604 = vst.msk [vmem:[%s255] sm:$0xff] %vm282, %v603
        %s605 = sand.u32 %s164, 1
        %s606 = scalar_lea.sflag [#allocation3], %s605
        %s607 = sand.u32 %s164, 1
        %s608 = smul.addr %s607, 8
        %s609 = scalar_lea.vmem [#allocation2], %s608
        // Predicated region
        $region45: #{tpu_custom_call.1} parent=43 // pred_check
          %p610 = pneg %p174
        $region46: #{tpu_custom_call.1} parent=43 // pred_check_branch
          %612 = sbr.rel (%p610) target = $region48
        $region47: #{tpu_custom_call.1} parent=43 // pred_region
          %s614 = ssub.s32 128, 128
          %615 = vsyncadd %s606, %s614
          %s616 = smul.addr %s20, 128
          %s617 = scalar_lea.hbm %s6, %s616
          %s619 = sshll.u32 %s609, 4
          %s620 = int_to_ptr.vmem [resolvable:$true] %s619
          %622 = dma.vmem_to_hbm [thread:$0]  %s620, 128, %s617, %s606
        $region48: #{tpu_custom_call.1} parent=43 // pred_fallthru
          _
      $region44: #{tpu_custom_call.1} parent=5 // pred_fallthru
        _
      %p623 = scmp.le.s32.totalorder 2, %s15
      // Predicated region
      $region49: #{tpu_custom_call.1} parent=5 // pred_check
        %p624 = pneg %p623
      $region50: #{tpu_custom_call.1} parent=5 // pred_check_branch
        %626 = sbr.rel (%p624) target = $region52
      $region51: #{tpu_custom_call.1} parent=5 // pred_region
        %s627 = ssub.s32 %s15, 2
        // Predicated region
        $region53: #{tpu_custom_call.1} parent=51 // pred_check
          %p628 = pneg %p180
        $region54: #{tpu_custom_call.1} parent=51 // pred_check_branch
          %630 = sbr.rel (%p628) target = $region56
        $region55: #{tpu_custom_call.1} parent=51 // pred_region
          %s631 = sand.u32 %s165, 1
          %s632 = scalar_lea.sflag [#allocation3], %s631
          %s633 = sand.u32 %s165, 1
          %s634 = smul.addr %s633, 8
          %s635 = scalar_lea.vmem [#allocation2], %s634
          %636 = dma.done %s632, 128
        $region56: #{tpu_custom_call.1} parent=51 // pred_fallthru
          _
      $region52: #{tpu_custom_call.1} parent=5 // pred_fallthru
        _
    $region6: #{tpu_custom_call.1} parent=1 // loop_footer
      %s19 = sadd.s32 1, %s15
    $region7: #{tpu_custom_call.1} parent=1 // loop_footer_branch
      %14 = sbr.rel target = $region3
    $region8: #{tpu_custom_call.1} parent=1 // loop_exit
      _
    %637 = vsyncpa [#allocation3], 1
    %s638 = scalar_lea.sflag [#allocation3], 1
    %639 = vsyncpa %s638, 1

// kernel: tpu_custom_call.1
$region0: #{tpu_custom_call.1}
  #allocation0 [shape = 'u32[]', space=smem, size = 0x4, offset = 0x4, fixed_abs, tag = 'smem constant byte address 0x4 - core index']
  #allocation1 [shape = 'u32[144,128]{1,0:T(1,128)}', space=vmem, size = 0x12000, scoped, tag = 'internal scratch']
  %s0 = inlined_call_operand.vmem [shape: f32[16,32], index: 0, kind: input, shape index: {}]
  %s1 = inlined_call_operand.vmem [shape: f32[16,32], index: 1, kind: input, shape index: {}]
  %s2 = inlined_call_operand.vmem [shape: f32[64,64], index: 2, kind: input, shape index: {}]
  %s3 = inlined_call_operand.vmem [shape: f32[64,32], index: 3, kind: input, shape index: {}]
  %s4 = inlined_call_operand.vmem [shape: f32[1,64], index: 4, kind: input, shape index: {}]
  %s5 = inlined_call_operand.vmem [shape: f32[1,32], index: 5, kind: input, shape index: {}]
  %s6 = inlined_call_operand.hbm [shape: f32[16,32], index: 6, kind: output, shape index: {}]
  %s7 = sld [smem:[#allocation0]]
  $region57: #{tpu_custom_call.1} parent=0
    _
  %s9 = ssub.s32 1, %s7
  %s10 = scalar_select 0, %s9, %s7
  $region1: #{tpu_custom_call.1} parent=0
    #allocation2 [shape = 'u8[8192]{0}', space=vmem, size = 0x2000, scoped, tag = 'output window, operand 0']
    #allocation3 [shape = 's32[2]{0}', space=sflag, size = 0x8, scoped, tag = 'scoped memory for tpu_custom_call.1']
    %11 = vsyncpa [#allocation3], 0
    %s12 = scalar_lea.sflag [#allocation3], 1
    %13 = vsyncpa %s12, 0
    loop: start=0, step=1, limit=4
    $region2: #{tpu_custom_call.1} parent=1 // loop_pre_header
      _
    $region3: #{tpu_custom_call.1} parent=1 // loop_header
      %s15 = sphi 0, %s19
      %p16 = scmp.ge.s32.totalorder %s15, 4
      %s25 = sphi 0, %s27
      %s28 = sphi 0, %s25
      %s29 = sphi 0, %s28
      %s45 = sphi 0, %s29
      %s51 = sphi 0, %s53
      %s54 = sphi 0, %s51
      %s55 = sphi 0, %s54
      %s71 = sphi 0, %s55
      %s75 = sphi 0, %s75
      %s77 = sphi 0, %s75
      %s78 = sphi 0, %s77
      %s92 = sphi 0, %s78
      %s96 = sphi 0, %s96
      %s98 = sphi 0, %s96
      %s99 = sphi 0, %s98
      %s113 = sphi 0, %s99
      %s117 = sphi 0, %s117
      %s119 = sphi 0, %s117
      %s120 = sphi 0, %s119
      %s134 = sphi 0, %s120
      %s138 = sphi 0, %s138
      %s140 = sphi 0, %s138
      %s141 = sphi 0, %s140
      %s155 = sphi 0, %s141
      %s161 = sphi 0, %s163
      %s164 = sphi 0, %s161
      %s165 = sphi 0, %s164
      %s181 = sphi 0, %s165
    $region4: #{tpu_custom_call.1} parent=1 // loop_header_branch
      %18 = sbr.rel (%p16) target = $region8
    $region5: #{tpu_custom_call.1} parent=1 // loop_body
      %s20 = ssub.s32 %s15, 1
      %s21 = ssub.s32 %s15, 2
      %s22 = sadd.s32 %s15, 1
      %s23 = ssub.s32 %s15, %s22
      %p24 = scmp.eq.s32.totalorder %s23, 0
      %s26 = sadd.s32 %s25, 1
      %s27 = scalar_select %p24, %s25, %s26
      %p30 = pneg %p24
      %p31 = scmp.eq.s32.totalorder %s15, 1
      %p32 = por %p30, %p31
      %p33 = scmp.ne.s32.totalorder %s25, %s28
      %p34 = scmp.eq.s32.totalorder %s15, 0
      %p35 = por %p33, %p34
      %p36 = scmp.ne.s32.totalorder %s25, %s28
      %p37 = scmp.eq.s32.totalorder %s20, 1
      %p38 = por %p36, %p37
      %p39 = scmp.ne.s32.totalorder %s28, %s29
      %p40 = scmp.eq.s32.totalorder %s20, 0
      %p41 = por %p39, %p40
      %p42 = scmp.ne.s32.totalorder %s28, %s29
      %p43 = scmp.eq.s32.totalorder %s21, 1
      %p44 = por %p42, %p43
      %p46 = scmp.ne.s32.totalorder %s29, %s45
      %p47 = scmp.eq.s32.totalorder %s21, 0
      %p48 = por %p46, %p47
      %s49 = ssub.s32 %s15, %s22
      %p50 = scmp.eq.s32.totalorder %s49, 0
      %s52 = sadd.s32 %s51, 1
      %s53 = scalar_select %p50, %s51, %s52
      %p56 = pneg %p50
      %p57 = scmp.eq.s32.totalorder %s15, 1
      %p58 = por %p56, %p57
      %p59 = scmp.ne.s32.totalorder %s51, %s54
      %p60 = scmp.eq.s32.totalorder %s15, 0
      %p61 = por %p59, %p60
      %p62 = scmp.ne.s32.totalorder %s51, %s54
      %p63 = scmp.eq.s32.totalorder %s20, 1
      %p64 = por %p62, %p63
      %p65 = scmp.ne.s32.totalorder %s54, %s55
      %p66 = scmp.eq.s32.totalorder %s20, 0
      %p67 = por %p65, %p66
      %p68 = scmp.ne.s32.totalorder %s54, %s55
      %p69 = scmp.eq.s32.totalorder %s21, 1
      %p70 = por %p68, %p69
      %p72 = scmp.ne.s32.totalorder %s55, %s71
      %p73 = scmp.eq.s32.totalorder %s21, 0
      %p74 = por %p72, %p73
      %s76 = sadd.s32 %s75, 1
      %p79 = scmp.eq.s32.totalorder %s15, 1
      %p80 = scmp.ne.s32.totalorder %s75, %s77
      %p81 = scmp.eq.s32.totalorder %s15, 0
      %p82 = por %p80, %p81
      %p83 = scmp.ne.s32.totalorder %s75, %s77
      %p84 = scmp.eq.s32.totalorder %s20, 1
      %p85 = por %p83, %p84
      %p86 = scmp.ne.s32.totalorder %s77, %s78
      %p87 = scmp.eq.s32.totalorder %s20, 0
      %p88 = por %p86, %p87
      %p89 = scmp.ne.s32.totalorder %s77, %s78
      %p90 = scmp.eq.s32.totalorder %s21, 1
      %p91 = por %p89, %p90
      %p93 = scmp.ne.s32.totalorder %s78, %s92
      %p94 = scmp.eq.s32.totalorder %s21, 0
      %p95 = por %p93, %p94
      %s97 = sadd.s32 %s96, 1
      %p100 = scmp.eq.s32.totalorder %s15, 1
      %p101 = scmp.ne.s32.totalorder %s96, %s98
      %p102 = scmp.eq.s32.totalorder %s15, 0
      %p103 = por %p101, %p102
      %p104 = scmp.ne.s32.totalorder %s96, %s98
      %p105 = scmp.eq.s32.totalorder %s20, 1
      %p106 = por %p104, %p105
      %p107 = scmp.ne.s32.totalorder %s98, %s99
      %p108 = scmp.eq.s32.totalorder %s20, 0
      %p109 = por %p107, %p108
      %p110 = scmp.ne.s32.totalorder %s98, %s99
      %p111 = scmp.eq.s32.totalorder %s21, 1
      %p112 = por %p110, %p111
      %p114 = scmp.ne.s32.totalorder %s99, %s113
      %p115 = scmp.eq.s32.totalorder %s21, 0
      %p116 = por %p114, %p115
      %s118 = sadd.s32 %s117, 1
      %p121 = scmp.eq.s32.totalorder %s15, 1
      %p122 = scmp.ne.s32.totalorder %s117, %s119
      %p123 = scmp.eq.s32.totalorder %s15, 0
      %p124 = por %p122, %p123
      %p125 = scmp.ne.s32.totalorder %s117, %s119
      %p126 = scmp.eq.s32.totalorder %s20, 1
      %p127 = por %p125, %p126
      %p128 = scmp.ne.s32.totalorder %s119, %s120
      %p129 = scmp.eq.s32.totalorder %s20, 0
      %p130 = por %p128, %p129
      %p131 = scmp.ne.s32.totalorder %s119, %s120
      %p132 = scmp.eq.s32.totalorder %s21, 1
      %p133 = por %p131, %p132
      %p135 = scmp.ne.s32.totalorder %s120, %s134
      %p136 = scmp.eq.s32.totalorder %s21, 0
      %p137 = por %p135, %p136
      %s139 = sadd.s32 %s138, 1
      %p142 = scmp.eq.s32.totalorder %s15, 1
      %p143 = scmp.ne.s32.totalorder %s138, %s140
      %p144 = scmp.eq.s32.totalorder %s15, 0
      %p145 = por %p143, %p144
      %p146 = scmp.ne.s32.totalorder %s138, %s140
      %p147 = scmp.eq.s32.totalorder %s20, 1
      %p148 = por %p146, %p147
      %p149 = scmp.ne.s32.totalorder %s140, %s141
      %p150 = scmp.eq.s32.totalorder %s20, 0
      %p151 = por %p149, %p150
      %p152 = scmp.ne.s32.totalorder %s140, %s141
      %p153 = scmp.eq.s32.totalorder %s21, 1
      %p154 = por %p152, %p153
      %p156 = scmp.ne.s32.totalorder %s141, %s155
      %p157 = scmp.eq.s32.totalorder %s21, 0
      %p158 = por %p156, %p157
      %s159 = ssub.s32 %s15, %s22
      %p160 = scmp.eq.s32.totalorder %s159, 0
      %s162 = sadd.s32 %s161, 1
      %s163 = scalar_select %p160, %s161, %s162
      %p166 = pneg %p160
      %p167 = scmp.eq.s32.totalorder %s15, 1
      %p168 = por %p166, %p167
      %p169 = scmp.ne.s32.totalorder %s161, %s164
      %p170 = scmp.eq.s32.totalorder %s15, 0
      %p171 = por %p169, %p170
      %p172 = scmp.ne.s32.totalorder %s161, %s164
      %p173 = scmp.eq.s32.totalorder %s20, 1
      %p174 = por %p172, %p173
      %p175 = scmp.ne.s32.totalorder %s164, %s165
      %p176 = scmp.eq.s32.totalorder %s20, 0
      %p177 = por %p175, %p176
      %p178 = scmp.ne.s32.totalorder %s164, %s165
      %p179 = scmp.eq.s32.totalorder %s21, 1
      %p180 = por %p178, %p179
      %p182 = scmp.ne.s32.totalorder %s165, %s181
      %p183 = scmp.eq.s32.totalorder %s21, 0
      %p184 = por %p182, %p183
      %p185 = scmp.le.s32.totalorder 1, %s15
      %p186 = scmp.lt.s32.totalorder %s15, 3
      %p187 = pnand %p185, %p186
      %p188 = pneg %p187
      // Predicated region
      $region9: #{tpu_custom_call.1} parent=5 // pred_check
        _
      $region10: #{tpu_custom_call.1} parent=5 // pred_check_branch
        %190 = sbr.rel (%p187) target = $region12
      $region11: #{tpu_custom_call.1} parent=5 // pred_region
        %s191 = ssub.s32 %s15, 1
        // Predicated region
        $region13: #{tpu_custom_call.1} parent=11 // pred_check
          %p192 = pneg %p88
        $region14: #{tpu_custom_call.1} parent=11 // pred_check_branch
          %194 = sbr.rel (%p192) target = $region16
        $region15: #{tpu_custom_call.1} parent=11 // pred_region
          _
        $region16: #{tpu_custom_call.1} parent=11 // pred_fallthru
          _
        // Predicated region
        $region17: #{tpu_custom_call.1} parent=11 // pred_check
          %p195 = pneg %p109
        $region18: #{tpu_custom_call.1} parent=11 // pred_check_branch
          %197 = sbr.rel (%p195) target = $region20
        $region19: #{tpu_custom_call.1} parent=11 // pred_region
          _
        $region20: #{tpu_custom_call.1} parent=11 // pred_fallthru
          _
        // Predicated region
        $region21: #{tpu_custom_call.1} parent=11 // pred_check
          %p198 = pneg %p130
        $region22: #{tpu_custom_call.1} parent=11 // pred_check_branch
          %200 = sbr.rel (%p198) target = $region24
        $region23: #{tpu_custom_call.1} parent=11 // pred_region
          _
        $region24: #{tpu_custom_call.1} parent=11 // pred_fallthru
          _
        // Predicated region
        $region25: #{tpu_custom_call.1} parent=11 // pred_check
          %p201 = pneg %p151
        $region26: #{tpu_custom_call.1} parent=11 // pred_check_branch
          %203 = sbr.rel (%p201) target = $region28
        $region27: #{tpu_custom_call.1} parent=11 // pred_region
          _
        $region28: #{tpu_custom_call.1} parent=11 // pred_fallthru
          _
      $region12: #{tpu_custom_call.1} parent=5 // pred_fallthru
        _
      %p204 = scmp.lt.s32.totalorder %s15, 2
      // Predicated region
      $region29: #{tpu_custom_call.1} parent=5 // pred_check
        %p205 = pneg %p204
      $region30: #{tpu_custom_call.1} parent=5 // pred_check_branch
        %207 = sbr.rel (%p205) target = $region32
      $region31: #{tpu_custom_call.1} parent=5 // pred_region
        // Predicated region
        $region33: #{tpu_custom_call.1} parent=31 // pred_check
          %p208 = pneg %p35
        $region34: #{tpu_custom_call.1} parent=31 // pred_check_branch
          %210 = sbr.rel (%p208) target = $region36
        $region35: #{tpu_custom_call.1} parent=31 // pred_region
          %p211 = scmp.lt.s32.totalorder %s15, 1
          %s212 = scalar_select %p211, %s15, 1
          %s213 = smul.addr %s212, 8
          %s214 = scalar_lea.vmem %s0, %s213
        $region36: #{tpu_custom_call.1} parent=31 // pred_fallthru
          _
        // Predicated region
        $region37: #{tpu_custom_call.1} parent=31 // pred_check
          %p215 = pneg %p61
        $region38: #{tpu_custom_call.1} parent=31 // pred_check_branch
          %217 = sbr.rel (%p215) target = $region40
        $region39: #{tpu_custom_call.1} parent=31 // pred_region
          %p218 = scmp.lt.s32.totalorder %s15, 1
          %s219 = scalar_select %p218, %s15, 1
          %s220 = smul.addr %s219, 8
          %s221 = scalar_lea.vmem %s1, %s220
        $region40: #{tpu_custom_call.1} parent=31 // pred_fallthru
          _
      $region32: #{tpu_custom_call.1} parent=5 // pred_fallthru
        _
      %p222 = scmp.le.s32.totalorder 1, %s15
      %p223 = scmp.lt.s32.totalorder %s15, 3
      %p224 = pnand %p222, %p223
      %p225 = pneg %p224
      // Predicated region
      $region41: #{tpu_custom_call.1} parent=5 // pred_check
        _
      $region42: #{tpu_custom_call.1} parent=5 // pred_check_branch
        %227 = sbr.rel (%p224) target = $region44
      $region43: #{tpu_custom_call.1} parent=5 // pred_region
        %s228 = ssub.s32 %s15, 1
        %p229 = scmp.lt.s32.totalorder %s20, 1
        %s230 = scalar_select %p229, %s20, 1
        %s231 = smul.addr %s230, 8
        %s232 = scalar_lea.vmem %s0, %s231
        %p233 = pneg %p41
        %p234 = pneg %p38
        %p235 = scmp.lt.s32.totalorder %s20, 1
        %s236 = scalar_select %p235, %s20, 1
        %s237 = smul.addr %s236, 8
        %s238 = scalar_lea.vmem %s1, %s237
        %p239 = pneg %p67
        %p240 = pneg %p64
        %p241 = pneg %p88
        %p242 = pneg %p85
        %p243 = pneg %p109
        %p244 = pneg %p106
        %p245 = pneg %p130
        %p246 = pneg %p127
        %p247 = pneg %p151
        %p248 = pneg %p148
        %p249 = pneg %p177
        %p250 = pneg %p174
        %s251 = sand.u32 %s164, 1
        %s252 = scalar_lea.sflag [#allocation3], %s251
        %s253 = sand.u32 %s164, 1
        %s254 = smul.addr %s253, 8
        %s255 = scalar_lea.vmem [#allocation2], %s254
        %p256 = scmp.lt.s32.totalorder %s20, 1
        %s257 = scalar_select %p256, %s20, 1
        %s258 = smul.addr %s257, 8
        %s259 = scalar_lea.vmem %s0, %s258
        %p260 = scmp.lt.s32.totalorder %s20, 1
        %s261 = scalar_select %p260, %s20, 1
        %s262 = smul.addr %s261, 8
        %s263 = scalar_lea.vmem %s1, %s262
        %v264 = vld [vmem:[%s259] sm:$0xff]
        %v265 = vld [vmem:[%s263] sm:$0xff]
        %v266 = vld [vmem:[%s2] sm:$0xff]
        %v267 = vld [vmem:[%s2 + $0x8] sm:$0xff]
        %v268 = vld [vmem:[%s2 + $0x10] sm:$0xff]
        %v269 = vld [vmem:[%s2 + $0x18] sm:$0xff]
        %v270 = vld [vmem:[%s2 + $0x20] sm:$0xff]
        %v271 = vld [vmem:[%s2 + $0x28] sm:$0xff]
        %v272 = vld [vmem:[%s2 + $0x30] sm:$0xff]
        %v273 = vld [vmem:[%s2 + $0x38] sm:$0xff]
        %v274 = vld [vmem:[%s3] sm:$0xff]
        %v275 = vld [vmem:[%s3 + $0x8] sm:$0xff]
        %v276 = vld [vmem:[%s3 + $0x10] sm:$0xff]
        %v277 = vld [vmem:[%s3 + $0x18] sm:$0xff]
        %v278 = vld [vmem:[%s3 + $0x20] sm:$0xff]
        %v279 = vld [vmem:[%s3 + $0x28] sm:$0xff]
        %v280 = vld [vmem:[%s3 + $0x30] sm:$0xff]
        %v281 = vld [vmem:[%s3 + $0x38] sm:$0xff]
        %vm282 = vcmask 261120
        %v284 = vsel %vm282, %v265, 0
        %286 = vmatprep.subr.mxu0 0.0
        %287 = vmatpush1.msra.mxu0 %v270
        %288 = vmatprep.subr.mxu0 0.0
        %289 = vmatpush1.msra.mxu0 %v271
        %290 = vmatprep.subr.mxu0 0.0
        %291 = vmatpush1.msra.mxu0 %v272
        %292 = vmatprep.subr.mxu0 0.0
        %293 = vmatpush1.msra.mxu0 %v273
        %294 = vmatprep.subr.mxu0 0.0
        %295 = vmatpush1.msra.mxu0 0.0
        %296 = vmatprep.subr.mxu0 0.0
        %297 = vmatpush1.msra.mxu0 0.0
        %298 = vmatprep.subr.mxu0 0.0
        %299 = vmatpush1.msra.mxu0 0.0
        %300 = vmatprep.subr.mxu0 0.0
        %301 = vmatpush1.msra.mxu0 0.0
        %302 = vmatprep.subr.mxu0 0.0
        %303 = vmatpush1.msra.mxu0 0.0
        %304 = vmatprep.subr.mxu0 0.0
        %305 = vmatpush1.msra.mxu0 0.0
        %306 = vmatprep.subr.mxu0 0.0
        %307 = vmatpush1.msra.mxu0 0.0
        %308 = vmatprep.subr.mxu0 0.0
        %309 = vmatpush1.msra.mxu0 0.0
        %310 = vmatprep.subr.mxu0 0.0
        %311 = vmatpush1.msra.mxu0 0.0
        %312 = vmatprep.subr.mxu0 0.0
        %313 = vmatpush1.msra.mxu0 0.0
        %314 = vmatprep.subr.mxu0 0.0
        %315 = vmatpush1.msra.mxu0 0.0
        %316 = vmatprep.subr.mxu0 0.0
        %317 = vmatpush1.msra.mxu0 0.0
        %318 = vmatprep.subr.mxu0 0.0
        %319 = vmatpush1.msra.mxu0 0.0
        %320 = vmatprep.subr.mxu0 0.0
        %321 = vmatpush1.msra.mxu0 0.0
        %322 = vmatprep.subr.mxu0 0.0
        %323 = vmatpush1.msra.mxu0 0.0
        %324 = vmatprep.subr.mxu0 0.0
        %325 = vmatpush1.msra.mxu0 0.0
        %326 = vmatprep.subr.mxu0 0.0
        %327 = vmatpush1.msra.mxu0 0.0
        %328 = vmatprep.subr.mxu0 0.0
        %329 = vmatpush1.msra.mxu0 0.0
        %330 = vmatprep.subr.mxu0 0.0
        %331 = vmatpush1.msra.mxu0 0.0
        %332 = vmatprep.subr.mxu0 0.0
        %333 = vmatpush1.msra.mxu0 0.0
        %334 = vmatprep.subr.mxu0 0.0
        %335 = vmatpush1.msra.mxu0 0.0
        %336 = vmatprep.subr.mxu0 0.0
        %337 = vmatpush1.msra.mxu0 0.0
        %338 = vmatprep.subr.mxu0 0.0
        %339 = vmatpush1.msra.mxu0 0.0
        %340 = vmatprep.subr.mxu0 0.0
        %341 = vmatpush1.msra.mxu0 0.0
        %342 = vmatprep.subr.mxu0 0.0
        %343 = vmatpush1.msra.mxu0 0.0
        %344 = vmatprep.subr.mxu0 0.0
        %345 = vmatpush1.msra.mxu0 0.0
        %346 = vmatprep.subr.mxu0 0.0
        %347 = vmatpush1.msra.mxu0 0.0
        %348 = vmatprep.subr.mxu0 0.0
        %349 = vmatpush1.msra.mxu0 0.0
        %350 = vmatprep.mubr.f32.mxu0 0.0
        %351 = vmatmul.mubr.f32.gmra.mrb[0].mxu0 %v284
        %v352 = vpop.f32.mrb[0].mxu0
        %v353 = vadd.f32 0.0, %v352
        %v354 = vpop.f32.mrb[0].mxu0
        %355 = vdwg.mxu0
        %v357 = vsel %vm282, %v264, 0
        %359 = vmatprep.subr.mxu0 0.0
        %360 = vmatpush1.msra.mxu0 %v266
        %361 = vmatprep.subr.mxu0 0.0
        %362 = vmatpush1.msra.mxu0 %v267
        %363 = vmatprep.subr.mxu0 0.0
        %364 = vmatpush1.msra.mxu0 %v268
        %365 = vmatprep.subr.mxu0 0.0
        %366 = vmatpush1.msra.mxu0 %v269
        %367 = vmatprep.subr.mxu0 0.0
        %368 = vmatpush1.msra.mxu0 0.0
        %369 = vmatprep.subr.mxu0 0.0
        %370 = vmatpush1.msra.mxu0 0.0
        %371 = vmatprep.subr.mxu0 0.0
        %372 = vmatpush1.msra.mxu0 0.0
        %373 = vmatprep.subr.mxu0 0.0
        %374 = vmatpush1.msra.mxu0 0.0
        %375 = vmatprep.subr.mxu0 0.0
        %376 = vmatpush1.msra.mxu0 0.0
        %377 = vmatprep.subr.mxu0 0.0
        %378 = vmatpush1.msra.mxu0 0.0
        %379 = vmatprep.subr.mxu0 0.0
        %380 = vmatpush1.msra.mxu0 0.0
        %381 = vmatprep.subr.mxu0 0.0
        %382 = vmatpush1.msra.mxu0 0.0
        %383 = vmatprep.subr.mxu0 0.0
        %384 = vmatpush1.msra.mxu0 0.0
        %385 = vmatprep.subr.mxu0 0.0
        %386 = vmatpush1.msra.mxu0 0.0
        %387 = vmatprep.subr.mxu0 0.0
        %388 = vmatpush1.msra.mxu0 0.0
        %389 = vmatprep.subr.mxu0 0.0
        %390 = vmatpush1.msra.mxu0 0.0
        %391 = vmatprep.subr.mxu0 0.0
        %392 = vmatpush1.msra.mxu0 0.0
        %393 = vmatprep.subr.mxu0 0.0
        %394 = vmatpush1.msra.mxu0 0.0
        %395 = vmatprep.subr.mxu0 0.0
        %396 = vmatpush1.msra.mxu0 0.0
        %397 = vmatprep.subr.mxu0 0.0
        %398 = vmatpush1.msra.mxu0 0.0
        %399 = vmatprep.subr.mxu0 0.0
        %400 = vmatpush1.msra.mxu0 0.0
        %401 = vmatprep.subr.mxu0 0.0
        %402 = vmatpush1.msra.mxu0 0.0
        %403 = vmatprep.subr.mxu0 0.0
        %404 = vmatpush1.msra.mxu0 0.0
        %405 = vmatprep.subr.mxu0 0.0
        %406 = vmatpush1.msra.mxu0 0.0
        %407 = vmatprep.subr.mxu0 0.0
        %408 = vmatpush1.msra.mxu0 0.0
        %409 = vmatprep.subr.mxu0 0.0
        %410 = vmatpush1.msra.mxu0 0.0
        %411 = vmatprep.subr.mxu0 0.0
        %412 = vmatpush1.msra.mxu0 0.0
        %413 = vmatprep.subr.mxu0 0.0
        %414 = vmatpush1.msra.mxu0 0.0
        %415 = vmatprep.subr.mxu0 0.0
        %416 = vmatpush1.msra.mxu0 0.0
        %417 = vmatprep.subr.mxu0 0.0
        %418 = vmatpush1.msra.mxu0 0.0
        %419 = vmatprep.subr.mxu0 0.0
        %420 = vmatpush1.msra.mxu0 0.0
        %421 = vmatprep.subr.mxu0 0.0
        %422 = vmatpush1.msra.mxu0 0.0
        %423 = vmatprep.mubr.f32.mxu0 0.0
        %424 = vmatmul.mubr.f32.gmra.mrb[0].mxu0 %v357
        %v425 = vpop.f32.mrb[0].mxu0
        %v426 = vadd.f32 %v353, %v425
        %v427 = vpop.f32.mrb[0].mxu0
        %428 = vdwg.mxu0
        %v429 = vld [vmem:[%s4] sm:$0x1]
        %v431 = vlaneseq
        %v432 = vshrl.u32 %v431, 7
        %v433 = vsub.s32 0, %v432
        %v434 = vrot.slane %v429, %v433
        %v436 = vadd.f32 %v426, %v434
        %v437 = vxor.u32 %v436, 2147483648
        %v438 = vmul.f32 %v437, 1.442695
        %v439 = vpow.pop %v438
        %v440 = vadd.f32 %v439, 1.0
        %v441 = vrcp.pop %v440
        %v442 = vmul.f32 1.0, %v441
        %443 = vrot.lane.b32.xlu0 %v265, 32
        %v444 = vpop.permute.xlu0 %443
        %v446 = vmul.f32 %v442, %v444
        %447 = vmatprep.subr.mxu0 0.0
        %448 = vmatpush1.msra.mxu0 %v278
        %449 = vmatprep.subr.mxu0 0.0
        %450 = vmatpush1.msra.mxu0 %v279
        %451 = vmatprep.subr.mxu0 0.0
        %452 = vmatpush1.msra.mxu0 %v280
        %453 = vmatprep.subr.mxu0 0.0
        %454 = vmatpush1.msra.mxu0 %v281
        %455 = vmatprep.subr.mxu0 0.0
        %456 = vmatpush1.msra.mxu0 0.0
        %457 = vmatprep.subr.mxu0 0.0
        %458 = vmatpush1.msra.mxu0 0.0
        %459 = vmatprep.subr.mxu0 0.0
        %460 = vmatpush1.msra.mxu0 0.0
        %461 = vmatprep.subr.mxu0 0.0
        %462 = vmatpush1.msra.mxu0 0.0
        %463 = vmatprep.subr.mxu0 0.0
        %464 = vmatpush1.msra.mxu0 0.0
        %465 = vmatprep.subr.mxu0 0.0
        %466 = vmatpush1.msra.mxu0 0.0
        %467 = vmatprep.subr.mxu0 0.0
        %468 = vmatpush1.msra.mxu0 0.0
        %469 = vmatprep.subr.mxu0 0.0
        %470 = vmatpush1.msra.mxu0 0.0
        %471 = vmatprep.subr.mxu0 0.0
        %472 = vmatpush1.msra.mxu0 0.0
        %473 = vmatprep.subr.mxu0 0.0
        %474 = vmatpush1.msra.mxu0 0.0
        %475 = vmatprep.subr.mxu0 0.0
        %476 = vmatpush1.msra.mxu0 0.0
        %477 = vmatprep.subr.mxu0 0.0
        %478 = vmatpush1.msra.mxu0 0.0
        %479 = vmatprep.subr.mxu0 0.0
        %480 = vmatpush1.msra.mxu0 0.0
        %481 = vmatprep.subr.mxu0 0.0
        %482 = vmatpush1.msra.mxu0 0.0
        %483 = vmatprep.subr.mxu0 0.0
        %484 = vmatpush1.msra.mxu0 0.0
        %485 = vmatprep.subr.mxu0 0.0
        %486 = vmatpush1.msra.mxu0 0.0
        %487 = vmatprep.subr.mxu0 0.0
        %488 = vmatpush1.msra.mxu0 0.0
        %489 = vmatprep.subr.mxu0 0.0
        %490 = vmatpush1.msra.mxu0 0.0
        %491 = vmatprep.subr.mxu0 0.0
        %492 = vmatpush1.msra.mxu0 0.0
        %493 = vmatprep.subr.mxu0 0.0
        %494 = vmatpush1.msra.mxu0 0.0
        %495 = vmatprep.subr.mxu0 0.0
        %496 = vmatpush1.msra.mxu0 0.0
        %497 = vmatprep.subr.mxu0 0.0
        %498 = vmatpush1.msra.mxu0 0.0
        %499 = vmatprep.subr.mxu0 0.0
        %500 = vmatpush1.msra.mxu0 0.0
        %501 = vmatprep.subr.mxu0 0.0
        %502 = vmatpush1.msra.mxu0 0.0
        %503 = vmatprep.subr.mxu0 0.0
        %504 = vmatpush1.msra.mxu0 0.0
        %505 = vmatprep.subr.mxu0 0.0
        %506 = vmatpush1.msra.mxu0 0.0
        %507 = vmatprep.subr.mxu0 0.0
        %508 = vmatpush1.msra.mxu0 0.0
        %509 = vmatprep.subr.mxu0 0.0
        %510 = vmatpush1.msra.mxu0 0.0
        %511 = vmatprep.mubr.f32.mxu0 0.0
        %512 = vmatmul.mubr.f32.gmra.mrb[0].mxu0 %v357
        %v513 = vpop.f32.mrb[0].mxu0
        %v514 = vadd.f32 0.0, %v513
        %v515 = vpop.f32.mrb[0].mxu0
        %516 = vdwg.mxu0
        %518 = vrot.lane.b32.xlu0 %v446, 96
        %v519 = vpop.permute.xlu0 %518
        %v520 = vsel %vm282, %v519, 0
        %522 = vmatprep.subr.mxu0 0.0
        %523 = vmatpush1.msra.mxu0 %v274
        %524 = vmatprep.subr.mxu0 0.0
        %525 = vmatpush1.msra.mxu0 %v275
        %526 = vmatprep.subr.mxu0 0.0
        %527 = vmatpush1.msra.mxu0 %v276
        %528 = vmatprep.subr.mxu0 0.0
        %529 = vmatpush1.msra.mxu0 %v277
        %530 = vmatprep.subr.mxu0 0.0
        %531 = vmatpush1.msra.mxu0 0.0
        %532 = vmatprep.subr.mxu0 0.0
        %533 = vmatpush1.msra.mxu0 0.0
        %534 = vmatprep.subr.mxu0 0.0
        %535 = vmatpush1.msra.mxu0 0.0
        %536 = vmatprep.subr.mxu0 0.0
        %537 = vmatpush1.msra.mxu0 0.0
        %538 = vmatprep.subr.mxu0 0.0
        %539 = vmatpush1.msra.mxu0 0.0
        %540 = vmatprep.subr.mxu0 0.0
        %541 = vmatpush1.msra.mxu0 0.0
        %542 = vmatprep.subr.mxu0 0.0
        %543 = vmatpush1.msra.mxu0 0.0
        %544 = vmatprep.subr.mxu0 0.0
        %545 = vmatpush1.msra.mxu0 0.0
        %546 = vmatprep.subr.mxu0 0.0
        %547 = vmatpush1.msra.mxu0 0.0
        %548 = vmatprep.subr.mxu0 0.0
        %549 = vmatpush1.msra.mxu0 0.0
        %550 = vmatprep.subr.mxu0 0.0
        %551 = vmatpush1.msra.mxu0 0.0
        %552 = vmatprep.subr.mxu0 0.0
        %553 = vmatpush1.msra.mxu0 0.0
        %554 = vmatprep.subr.mxu0 0.0
        %555 = vmatpush1.msra.mxu0 0.0
        %556 = vmatprep.subr.mxu0 0.0
        %557 = vmatpush1.msra.mxu0 0.0
        %558 = vmatprep.subr.mxu0 0.0
        %559 = vmatpush1.msra.mxu0 0.0
        %560 = vmatprep.subr.mxu0 0.0
        %561 = vmatpush1.msra.mxu0 0.0
        %562 = vmatprep.subr.mxu0 0.0
        %563 = vmatpush1.msra.mxu0 0.0
        %564 = vmatprep.subr.mxu0 0.0
        %565 = vmatpush1.msra.mxu0 0.0
        %566 = vmatprep.subr.mxu0 0.0
        %567 = vmatpush1.msra.mxu0 0.0
        %568 = vmatprep.subr.mxu0 0.0
        %569 = vmatpush1.msra.mxu0 0.0
        %570 = vmatprep.subr.mxu0 0.0
        %571 = vmatpush1.msra.mxu0 0.0
        %572 = vmatprep.subr.mxu0 0.0
        %573 = vmatpush1.msra.mxu0 0.0
        %574 = vmatprep.subr.mxu0 0.0
        %575 = vmatpush1.msra.mxu0 0.0
        %576 = vmatprep.subr.mxu0 0.0
        %577 = vmatpush1.msra.mxu0 0.0
        %578 = vmatprep.subr.mxu0 0.0
        %579 = vmatpush1.msra.mxu0 0.0
        %580 = vmatprep.subr.mxu0 0.0
        %581 = vmatpush1.msra.mxu0 0.0
        %582 = vmatprep.subr.mxu0 0.0
        %583 = vmatpush1.msra.mxu0 0.0
        %584 = vmatprep.subr.mxu0 0.0
        %585 = vmatpush1.msra.mxu0 0.0
        %586 = vmatprep.mubr.f32.mxu0 0.0
        %587 = vmatmul.mubr.f32.gmra.mrb[0].mxu0 %v520
        %v588 = vpop.f32.mrb[0].mxu0
        %v589 = vadd.f32 %v514, %v588
        %v590 = vpop.f32.mrb[0].mxu0
        %591 = vdwg.mxu0
        %v592 = vld [vmem:[%s5] sm:$0x1]
        %v594 = vlaneseq
        %v595 = vshrl.u32 %v594, 7
        %v596 = vsub.s32 0, %v595
        %v597 = vrot.slane %v592, %v596
        %v599 = vadd.f32 %v589, %v597
        %v600 = vtanh.pop %v599
        %v601 = vsub.f32 %v600, %v265
        %v602 = vmul.f32 %v442, %v601
        %v603 = vadd.f32 %v265, %v602
        %604 = vst.msk [vmem:[%s255] sm:$0xff] %vm282, %v603
        %s605 = sand.u32 %s164, 1
        %s606 = scalar_lea.sflag [#allocation3], %s605
        %s607 = sand.u32 %s164, 1
        %s608 = smul.addr %s607, 8
        %s609 = scalar_lea.vmem [#allocation2], %s608
        // Predicated region
        $region45: #{tpu_custom_call.1} parent=43 // pred_check
          %p610 = pneg %p174
        $region46: #{tpu_custom_call.1} parent=43 // pred_check_branch
          %612 = sbr.rel (%p610) target = $region48
        $region47: #{tpu_custom_call.1} parent=43 // pred_region
          %s614 = ssub.s32 128, 128
          %615 = vsyncadd %s606, %s614
          %s616 = smul.addr %s20, 128
          %s617 = scalar_lea.hbm %s6, %s616
          %s619 = sshll.u32 %s609, 4
          %s620 = int_to_ptr.vmem [resolvable:$true] %s619
          %622 = dma.vmem_to_hbm [thread:$0]  %s620, 128, %s617, %s606
        $region48: #{tpu_custom_call.1} parent=43 // pred_fallthru
          _
      $region44: #{tpu_custom_call.1} parent=5 // pred_fallthru
        _
      %p623 = scmp.le.s32.totalorder 2, %s15
      // Predicated region
      $region49: #{tpu_custom_call.1} parent=5 // pred_check
        %p624 = pneg %p623
      $region50: #{tpu_custom_call.1} parent=5 // pred_check_branch
        %626 = sbr.rel (%p624) target = $region52
      $region51: #{tpu_custom_call.1} parent=5 // pred_region
        %s627 = ssub.s32 %s15, 2
        // Predicated region
        $region53: #{tpu_custom_call.1} parent=51 // pred_check
          %p628 = pneg %p180
        $region54: #{tpu_custom_call.1} parent=51 // pred_check_branch
          %630 = sbr.rel (%p628) target = $region56
        $region55: #{tpu_custom_call.1} parent=51 // pred_region
          %s631 = sand.u32 %s165, 1
          %s632 = scalar_lea.sflag [#allocation3], %s631
          %s633 = sand.u32 %s165, 1
          %s634 = smul.addr %s633, 8
          %s635 = scalar_lea.vmem [#allocation2], %s634
          %636 = dma.done %s632, 128
        $region56: #{tpu_custom_call.1} parent=51 // pred_fallthru
          _
      $region52: #{tpu_custom_call.1} parent=5 // pred_fallthru
        _
    $region6: #{tpu_custom_call.1} parent=1 // loop_footer
      %s19 = sadd.s32 1, %s15
    $region7: #{tpu_custom_call.1} parent=1 // loop_footer_branch
      %14 = sbr.rel target = $region3
    $region8: #{tpu_custom_call.1} parent=1 // loop_exit
      _
    %637 = vsyncpa [#allocation3], 1
    %s638 = scalar_lea.sflag [#allocation3], 1
    %639 = vsyncpa %s638, 1

</llo_original>
